<compile_context>
chip_gen: v7x
topology: tpu7x:2x2x1
jax: 0.10.0
libtpu: 0.0.40
codegen_flags: <defaults>
</compile_context>

<pallas_src>
import jax
import jax.numpy as jnp
from jax import lax
from jax.experimental import pallas as pl
from jax.experimental.pallas import tpu as pltpu

# ----------------------------- config (small) -------------------------------
B = 2            # batch
L = 8            # sequence length (context length)
D = 32           # transformer width
H = 4            # attention heads
HD = D // H      # head dim
NL = 2           # number of resblocks
P = 16           # text projection dim
FF = 4 * D       # mlp hidden
LN_EPS = 1e-5
OUT_LANES = 128  # lane-dense output width (pad P and L up to 128)
NEG_INF = -1e30  # finite additive mask value


# ------------------------------- kernel -------------------------------------
def _layer_norm(v, w, b):
    m = jnp.mean(v, axis=-1, keepdims=True)
    var = jnp.mean((v - m) ** 2, axis=-1, keepdims=True)
    return (v - m) * lax.rsqrt(var + LN_EPS) * w + b


def encoder_kernel(x_ref,            # [B*L, D]      prompts + pos_emb (flattened)
                   oh_ref,           # [B, B*L]      one-hot of CLS token index
                   mask_ref,         # [B*L, B*L]    block-diag causal additive mask
                   bsel_ref,         # [B*L, L]      per-block column selector
                   ln1_w, ln1_b,     # [NL, 1, D]
                   in_w, in_b,       # [NL, D, 3D] bf16, [NL, 1, 3D]  (Q scale folded in)
                   wo_h, bo,         # [NL, H, HD, D] bf16, [NL, 1, D]
                   ln2_w, ln2_b,     # [NL, 1, D]
                   fc_w, fc_b,       # [NL, D, FF] bf16, [NL, 1, FF]
                   pj_w, pj_b,       # [NL, FF, D] bf16, [NL, 1, D]
                   lnf_w, lnf_b,     # [1, D]
                   tproj,            # [D, OUT_LANES] bf16 (zero-padded past P)
                   out_ref,          # out: [B, 2*OUT_LANES]
                   x_scr,            # scratch: [B*L, D] f32 (activations, carried)
                   attn_scr):        # scratch: [B, L] f32 (CLS attn accumulator)
    layer = pl.program_id(0)

    @pl.when(layer == 0)
    def _():
        x_scr[...] = x_ref[...].astype(jnp.float32)
        attn_scr[...] = jnp.zeros_like(attn_scr)

    x = x_scr[...]                               # [B*L, D] carried activations
    onehot = oh_ref[...]                         # [B, B*L]
    mask = mask_ref[...]                         # [B*L, B*L]

    # ---- ln_1 + fused QKV projection (bf16 MXU, f32 accumulate) ----
    xn = _layer_norm(x, ln1_w[0], ln1_b[0])                                 # [B*L, D]
    qkv = jnp.dot(xn.astype(jnp.bfloat16), in_w[0],
                  preferred_element_type=jnp.float32) + in_b[0]             # [B*L, 3D]

    # one head-major relayout per tensor per layer (leading-axis stack; no per-batch loop)
    q3 = jnp.stack([qkv[:, h * HD:(h + 1) * HD] for h in range(H)],
                   axis=0).astype(jnp.bfloat16)                             # [H, B*L, HD]
    k3 = jnp.stack([qkv[:, D + h * HD:D + (h + 1) * HD] for h in range(H)],
                   axis=0).astype(jnp.bfloat16)
    v3 = jnp.stack([qkv[:, 2 * D + h * HD:2 * D + (h + 1) * HD] for h in range(H)],
                   axis=0).astype(jnp.bfloat16)

    # ---- packed attention over all B*L tokens; mask removes cross-batch mixing ----
    s = jnp.einsum('hld,hmd->hlm', q3, k3,
                   preferred_element_type=jnp.float32) + mask[None]         # [H, B*L, B*L]
    s = s - jnp.max(s, axis=-1, keepdims=True)
    e = jnp.exp(s)
    p = e * pl.reciprocal(jnp.sum(e, axis=-1, keepdims=True), approx=True)  # [H, B*L, B*L]

    o3 = jnp.einsum('hlm,hmd->hld', p.astype(jnp.bfloat16), v3,
                    preferred_element_type=jnp.float32)                     # [H, B*L, HD]
    ob = jnp.einsum('hld,hdo->hlo', o3.astype(jnp.bfloat16), wo_h[0],
                    preferred_element_type=jnp.float32)                     # [H, B*L, D]
    x = x + jnp.sum(ob, axis=0) + bo[0]                                     # attn residual

    # ---- CLS row of the head-averaged probs: one-hot gather + block column select ----
    p_avg = jnp.mean(p, axis=0)                                             # [B*L, B*L]
    cls_full = jnp.dot(onehot, p_avg, preferred_element_type=jnp.float32)   # [B, B*L]
    attn_scr[...] = attn_scr[...] + jnp.dot(cls_full, bsel_ref[...],
                                            preferred_element_type=jnp.float32)  # [B, L]

    # ---- ln_2 + MLP (c_fc -> QuickGELU -> c_proj) ----
    xn2 = _layer_norm(x, ln2_w[0], ln2_b[0])
    h1 = jnp.dot(xn2.astype(jnp.bfloat16), fc_w[0],
                 preferred_element_type=jnp.float32) + fc_b[0]
    h1 = h1 * jax.nn.sigmoid(1.702 * h1)                                    # QuickGELU (f32)
    h2 = jnp.dot(h1.astype(jnp.bfloat16), pj_w[0],
                 preferred_element_type=jnp.float32) + pj_b[0]
    x = x + h2
    x_scr[...] = x                                                          # carry to next layer

    @pl.when(layer == NL - 1)
    def _():
        # ln_final + CLS gather (one-hot matmul) + padded text projection
        xf = _layer_norm(x, lnf_w[...], lnf_b[...])                         # [B*L, D]
        cls_tok = jnp.dot(onehot, xf, preferred_element_type=jnp.float32)   # [B, D]
        feat = jnp.dot(cls_tok.astype(jnp.bfloat16), tproj[...],
                       preferred_element_type=jnp.float32)                  # [B, 128]
        # layer-averaged CLS attention, exactly renormalized (removes approx-recip error)
        attn = attn_scr[...] * (1.0 / NL)                                   # [B, L]
        attn = attn / jnp.sum(attn, axis=-1, keepdims=True)
        attn_pad = jnp.concatenate(
            [attn, jnp.zeros((B, OUT_LANES - L), jnp.float32)], axis=-1)    # [B, 128]
        out_ref[...] = jnp.concatenate([feat, attn_pad], axis=-1)           # [B, 256]


# ------------------------------- wrapper -------------------------------------
def _inv_spec(shape):
    nd = len(shape)
    return pl.BlockSpec(tuple(shape), lambda l, _nd=nd: (0,) * _nd)


def _layer_spec(shape):
    nd = len(shape)
    return pl.BlockSpec((1,) + tuple(shape[1:]),
                        lambda l, _nd=nd: (l,) + (0,) * (_nd - 1))


@jax.jit
def exposed_text_encoder(prompts, tokenized_prompts, pos_emb, params):
    """prompts: [B, L, D] f32; tokenized_prompts: [B, L] int32.
    Returns (text_features [B, P], attn_probs [B, L])."""
    cls_idx = jnp.argmax(tokenized_prompts, axis=-1)                        # [B] (EOT token)
    x = (prompts + pos_emb[None]).astype(jnp.float32).reshape(B * L, D)
    # one-hot of flattened CLS position: row b has 1 at column b*L + cls_idx[b]
    onehot = jax.nn.one_hot(jnp.arange(B) * L + cls_idx, B * L, dtype=jnp.float32)

    # packed block-diagonal causal mask + per-block column selector (built outside the kernel)
    idx = jnp.arange(B * L)
    same_blk = (idx[:, None] // L) == (idx[None, :] // L)
    causal = (idx[None, :] % L) <= (idx[:, None] % L)
    mask = jnp.where(same_blk & causal, 0.0, NEG_INF).astype(jnp.float32)   # [B*L, B*L]
    blocksel = ((idx[:, None] % L) == jnp.arange(L)[None, :]).astype(jnp.float32)  # [B*L, L]

    per_layer = params[:12]        # [NL, ...] arrays, streamed one layer per grid step
    invariant = params[12:]        # ln_final + text projection
    inputs = [x, onehot, mask, blocksel, *per_layer, *invariant]
    in_specs = ([_inv_spec(x.shape), _inv_spec(onehot.shape),
                 _inv_spec(mask.shape), _inv_spec(blocksel.shape)]
                + [_layer_spec(p.shape) for p in per_layer]
                + [_inv_spec(p.shape) for p in invariant])

    out = pl.pallas_call(
        encoder_kernel,
        grid=(NL,),
        in_specs=in_specs,
        out_specs=_inv_spec((B, 2 * OUT_LANES)),
        out_shape=jax.ShapeDtypeStruct((B, 2 * OUT_LANES), jnp.float32),
        scratch_shapes=[pltpu.VMEM((B * L, D), jnp.float32),   # activations carried over layers
                        pltpu.VMEM((B, L), jnp.float32)],      # CLS attention accumulator
        compiler_params=pltpu.CompilerParams(
            dimension_semantics=("arbitrary",),
            vmem_limit_bytes=32 * 1024 * 1024),
    )(*inputs)

    return out[:, :P], out[:, OUT_LANES:OUT_LANES + L]


# -------------------------- deterministic params -----------------------------
def make_params(key):
    ks = jax.random.split(key, 6)
    s = 0.02
    scale = 1.0 / (HD ** 0.5)

    ln1_w = jnp.ones((NL, 1, D), jnp.float32)
    ln1_b = jnp.zeros((NL, 1, D), jnp.float32)

    # nn.MultiheadAttention in_proj: y = x @ W^T + b -> store W^T so kernel does x @ W.
    # Fold the 1/sqrt(head_dim) attention scale into the Q slice of weight AND bias
    # (valid because PyTorch scales q after the full affine projection).
    in_w = (s * jax.random.normal(ks[0], (NL, 3 * D, D))).transpose(0, 2, 1)    # [NL, D, 3D]
    in_b = jnp.zeros((NL, 1, 3 * D), jnp.float32)
    in_w = in_w.at[:, :, :D].multiply(scale)
    in_b = in_b.at[:, :, :D].multiply(scale)

    # out_proj: y = o @ W^T + b -> store W^T reshaped per head: [NL, H, HD, D]
    out_w = (s * jax.random.normal(ks[1], (NL, D, D))).transpose(0, 2, 1)
    wo_h = out_w.reshape(NL, H, HD, D)
    bo = jnp.zeros((NL, 1, D), jnp.float32)

    ln2_w = jnp.ones((NL, 1, D), jnp.float32)
    ln2_b = jnp.zeros((NL, 1, D), jnp.float32)

    fc_w = (s * jax.random.normal(ks[2], (NL, FF, D))).transpose(0, 2, 1)       # [NL, D, FF]
    fc_b = jnp.zeros((NL, 1, FF), jnp.float32)
    pj_w = (s * jax.random.normal(ks[3], (NL, D, FF))).transpose(0, 2, 1)       # [NL, FF, D]
    pj_b = jnp.zeros((NL, 1, D), jnp.float32)

    lnf_w = jnp.ones((1, D), jnp.float32)
    lnf_b = jnp.zeros((1, D), jnp.float32)

    # text projection, zero-padded to a lane-dense 128-wide slab
    tproj = s * jax.random.normal(ks[4], (D, P))
    tproj_pad = jnp.zeros((D, OUT_LANES), jnp.float32).at[:, :P].set(tproj)

    pos_emb = (s * jax.random.normal(ks[5], (L, D))).astype(jnp.float32)

    # matmul weights in bf16 (MXU-native, half the DMA bytes); LN params / biases in f32
    params = (ln1_w, ln1_b,
              in_w.astype(jnp.bfloat16), in_b,
              wo_h.astype(jnp.bfloat16), bo,
              ln2_w, ln2_b,
              fc_w.astype(jnp.bfloat16), fc_b,
              pj_w.astype(jnp.bfloat16), pj_b,
              lnf_w, lnf_b, tproj_pad.astype(jnp.bfloat16))
    return pos_emb, params


# --------------------------------- main ---------------------------------------
if __name__ == "__main__":
    key = jax.random.PRNGKey(0)
    k_prompt, k_tok, k_param = jax.random.split(key, 3)

    prompts = jax.random.normal(k_prompt, (B, L, D), jnp.float32)
    tokenized_prompts = jax.random.randint(k_tok, (B, L), 1, 1000, jnp.int32)
    pos_emb, params = make_params(k_param)

    text_feats, attn_probs = exposed_text_encoder(
        prompts, tokenized_prompts, pos_emb, params)
    jax.block_until_ready((text_feats, attn_probs))

    assert text_feats.shape == (B, P)
    assert attn_probs.shape == (B, L)
    assert bool(jnp.all(jnp.isfinite(text_feats)))
    assert bool(jnp.all(jnp.isfinite(attn_probs)))
    # exposed attention rows are exactly renormalized -> sum to 1
    assert bool(jnp.allclose(jnp.sum(attn_probs, axis=-1), 1.0, atol=1e-3))

    print("KERNEL_OK")
</pallas_src>

<mosaic_0001>
module attributes {stable_mosaic.version = 11 : i64} {
  func.func @encoder_kernel(%arg0: i32, %arg1: memref<16x32xf32, #tpu.memory_space<vmem>>, %arg2: memref<2x16xf32, #tpu.memory_space<vmem>>, %arg3: memref<16x16xf32, #tpu.memory_space<vmem>>, %arg4: memref<16x8xf32, #tpu.memory_space<vmem>>, %arg5: memref<1x1x32xf32, #tpu.memory_space<vmem>>, %arg6: memref<1x1x32xf32, #tpu.memory_space<vmem>>, %arg7: memref<1x32x96xbf16, #tpu.memory_space<vmem>>, %arg8: memref<1x1x96xf32, #tpu.memory_space<vmem>>, %arg9: memref<1x4x8x32xbf16, #tpu.memory_space<vmem>>, %arg10: memref<1x1x32xf32, #tpu.memory_space<vmem>>, %arg11: memref<1x1x32xf32, #tpu.memory_space<vmem>>, %arg12: memref<1x1x32xf32, #tpu.memory_space<vmem>>, %arg13: memref<1x32x128xbf16, #tpu.memory_space<vmem>>, %arg14: memref<1x1x128xf32, #tpu.memory_space<vmem>>, %arg15: memref<1x128x32xbf16, #tpu.memory_space<vmem>>, %arg16: memref<1x1x32xf32, #tpu.memory_space<vmem>>, %arg17: memref<1x32xf32, #tpu.memory_space<vmem>>, %arg18: memref<1x32xf32, #tpu.memory_space<vmem>>, %arg19: memref<32x128xbf16, #tpu.memory_space<vmem>>, %arg20: memref<2x256xf32, #tpu.memory_space<vmem>>, %arg21: memref<16x32xf32, #tpu.memory_space<vmem>>, %arg22: memref<2x8xf32, #tpu.memory_space<vmem>>) attributes {dimension_semantics = [#tpu.dimension_semantics<arbitrary>], iteration_bounds = array<i64: 2>, scalar_prefetch = 0 : i64, scratch_operands = 2 : i64, tpu.core_type = #tpu.core_type<tc>, window_params = [{pipeline_mode = #tpu.pipeline_mode<synchronous>, transform_indices = @transform_0, window_bounds = array<i64: 16, 32>}, {pipeline_mode = #tpu.pipeline_mode<synchronous>, transform_indices = @transform_1, window_bounds = array<i64: 2, 16>}, {pipeline_mode = #tpu.pipeline_mode<synchronous>, transform_indices = @transform_2, window_bounds = array<i64: 16, 16>}, {pipeline_mode = #tpu.pipeline_mode<synchronous>, transform_indices = @transform_3, window_bounds = array<i64: 16, 8>}, {transform_indices = @transform_4, window_bounds = array<i64: 1, 1, 32>}, {transform_indices = @transform_5, window_bounds = array<i64: 1, 1, 32>}, {transform_indices = @transform_6, window_bounds = array<i64: 1, 32, 96>}, {transform_indices = @transform_7, window_bounds = array<i64: 1, 1, 96>}, {transform_indices = @transform_8, window_bounds = array<i64: 1, 4, 8, 32>}, {transform_indices = @transform_9, window_bounds = array<i64: 1, 1, 32>}, {transform_indices = @transform_10, window_bounds = array<i64: 1, 1, 32>}, {transform_indices = @transform_11, window_bounds = array<i64: 1, 1, 32>}, {transform_indices = @transform_12, window_bounds = array<i64: 1, 32, 128>}, {transform_indices = @transform_13, window_bounds = array<i64: 1, 1, 128>}, {transform_indices = @transform_14, window_bounds = array<i64: 1, 128, 32>}, {transform_indices = @transform_15, window_bounds = array<i64: 1, 1, 32>}, {pipeline_mode = #tpu.pipeline_mode<synchronous>, transform_indices = @transform_16, window_bounds = array<i64: 1, 32>}, {pipeline_mode = #tpu.pipeline_mode<synchronous>, transform_indices = @transform_17, window_bounds = array<i64: 1, 32>}, {pipeline_mode = #tpu.pipeline_mode<synchronous>, transform_indices = @transform_18, window_bounds = array<i64: 32, 128>}, {pipeline_mode = #tpu.pipeline_mode<synchronous>, transform_indices = @transform_19, window_bounds = array<i64: 2, 256>}]} {
    %c0_i32 = arith.constant 0 : i32
    %0 = arith.cmpi eq, %arg0, %c0_i32 : i32
    %1 = arith.extui %0 : i1 to i32
    %c0_i32_0 = arith.constant 0 : i32
    %2 = arith.cmpi ne, %1, %c0_i32_0 : i32
    scf.if %2 {
      %c0_76 = arith.constant 0 : index
      %c0_77 = arith.constant 0 : index
      %160 = vector.load %arg1[%c0_76, %c0_77] : memref<16x32xf32, #tpu.memory_space<vmem>>, vector<16x32xf32>
      %c0_78 = arith.constant 0 : index
      %c0_79 = arith.constant 0 : index
      %161 = vector.load %arg21[%c0_78, %c0_79] : memref<16x32xf32, #tpu.memory_space<vmem>>, vector<16x32xf32>
      tpu.vector_store %arg21[%c0_78, %c0_79], %160 {strides = array<i32>} : memref<16x32xf32, #tpu.memory_space<vmem>>, vector<16x32xf32>,
      %cst_80 = arith.constant 0.000000e+00 : f32
      %162 = vector.broadcast %cst_80 : f32 to vector<2x8xf32>
      %c0_81 = arith.constant 0 : index
      %c0_82 = arith.constant 0 : index
      %163 = vector.load %arg22[%c0_81, %c0_82] : memref<2x8xf32, #tpu.memory_space<vmem>>, vector<2x8xf32>
      tpu.vector_store %arg22[%c0_81, %c0_82], %162 {strides = array<i32>} : memref<2x8xf32, #tpu.memory_space<vmem>>, vector<2x8xf32>,
    } else {
    }
    %c0 = arith.constant 0 : index
    %c0_1 = arith.constant 0 : index
    %3 = vector.load %arg21[%c0, %c0_1] : memref<16x32xf32, #tpu.memory_space<vmem>>, vector<16x32xf32>
    %c0_2 = arith.constant 0 : index
    %c0_3 = arith.constant 0 : index
    %4 = vector.load %arg2[%c0_2, %c0_3] : memref<2x16xf32, #tpu.memory_space<vmem>>, vector<2x16xf32>
    %c0_4 = arith.constant 0 : index
    %c0_5 = arith.constant 0 : index
    %5 = vector.load %arg3[%c0_4, %c0_5] : memref<16x16xf32, #tpu.memory_space<vmem>>, vector<16x16xf32>
    %c0_6 = arith.constant 0 : index
    %c0_7 = arith.constant 0 : index
    %c0_8 = arith.constant 0 : index
    %6 = vector.load %arg5[%c0_6, %c0_7, %c0_8] : memref<1x1x32xf32, #tpu.memory_space<vmem>>, vector<1x1x32xf32>
    %7 = vector.shape_cast %6 : vector<1x1x32xf32> to vector<1x32xf32>
    %c0_9 = arith.constant 0 : index
    %c0_10 = arith.constant 0 : index
    %c0_11 = arith.constant 0 : index
    %8 = vector.load %arg6[%c0_9, %c0_10, %c0_11] : memref<1x1x32xf32, #tpu.memory_space<vmem>>, vector<1x1x32xf32>
    %9 = vector.shape_cast %8 : vector<1x1x32xf32> to vector<1x32xf32>
    %cst = arith.constant dense<0.000000e+00> : vector<16xf32>
    %10 = vector.multi_reduction <add>, %3, %cst [1] : vector<16x32xf32> to vector<16xf32>
    %11 = vector.shape_cast %10 : vector<16xf32> to vector<16x1xf32>
    %cst_12 = arith.constant 3.200000e+01 : f32
    %12 = vector.broadcast %cst_12 : f32 to vector<16x1xf32>
    %13 = arith.divf %11, %12 : vector<16x1xf32>
    %14 = vector.broadcast %13 : vector<16x1xf32> to vector<16x32xf32>
    %15 = arith.subf %3, %14 : vector<16x32xf32>
    %16 = arith.mulf %15, %15 : vector<16x32xf32>
    %cst_13 = arith.constant dense<0.000000e+00> : vector<16xf32>
    %17 = vector.multi_reduction <add>, %16, %cst_13 [1] : vector<16x32xf32> to vector<16xf32>
    %18 = vector.shape_cast %17 : vector<16xf32> to vector<16x1xf32>
    %cst_14 = arith.constant 3.200000e+01 : f32
    %19 = vector.broadcast %cst_14 : f32 to vector<16x1xf32>
    %20 = arith.divf %18, %19 : vector<16x1xf32>
    %21 = vector.broadcast %13 : vector<16x1xf32> to vector<16x32xf32>
    %22 = arith.subf %3, %21 : vector<16x32xf32>
    %cst_15 = arith.constant 9.99999974E-6 : f32
    %23 = vector.broadcast %cst_15 : f32 to vector<16x1xf32>
    %24 = arith.addf %20, %23 : vector<16x1xf32>
    %25 = math.rsqrt %24 : vector<16x1xf32>
    %26 = vector.broadcast %25 : vector<16x1xf32> to vector<16x32xf32>
    %27 = arith.mulf %22, %26 : vector<16x32xf32>
    %28 = vector.broadcast %7 : vector<1x32xf32> to vector<16x32xf32>
    %29 = arith.mulf %27, %28 : vector<16x32xf32>
    %30 = vector.broadcast %9 : vector<1x32xf32> to vector<16x32xf32>
    %31 = arith.addf %29, %30 : vector<16x32xf32>
    %32 = arith.truncf %31 : vector<16x32xf32> to vector<16x32xbf16>
    %c0_16 = arith.constant 0 : index
    %c0_17 = arith.constant 0 : index
    %c0_18 = arith.constant 0 : index
    %33 = vector.load %arg7[%c0_16, %c0_17, %c0_18] : memref<1x32x96xbf16, #tpu.memory_space<vmem>>, vector<1x32x96xbf16>
    %34 = vector.shape_cast %33 : vector<1x32x96xbf16> to vector<32x96xbf16>
    %cst_19 = arith.constant dense<0.000000e+00> : vector<16x96xf32>
    %35 = tpu.matmul %32, %34, %cst_19 {dimension_numbers = #tpu.dot_dimension_numbers<[1], [0], [0], [1], [0, 0, 1, 1], [], []>} : vector<16x32xbf16>, vector<32x96xbf16>, vector<16x96xf32> -> vector<16x96xf32>
    %c0_20 = arith.constant 0 : index
    %c0_21 = arith.constant 0 : index
    %c0_22 = arith.constant 0 : index
    %36 = vector.load %arg8[%c0_20, %c0_21, %c0_22] : memref<1x1x96xf32, #tpu.memory_space<vmem>>, vector<1x1x96xf32>
    %37 = vector.shape_cast %36 : vector<1x1x96xf32> to vector<1x96xf32>
    %38 = vector.broadcast %37 : vector<1x96xf32> to vector<16x96xf32>
    %39 = arith.addf %35, %38 : vector<16x96xf32>
    %40 = vector.extract_strided_slice %39 {offsets = [0, 0], sizes = [16, 8], strides = [1, 1]} : vector<16x96xf32> to vector<16x8xf32>
    %41 = vector.extract_strided_slice %39 {offsets = [0, 8], sizes = [16, 8], strides = [1, 1]} : vector<16x96xf32> to vector<16x8xf32>
    %42 = vector.extract_strided_slice %39 {offsets = [0, 16], sizes = [16, 8], strides = [1, 1]} : vector<16x96xf32> to vector<16x8xf32>
    %43 = vector.extract_strided_slice %39 {offsets = [0, 24], sizes = [16, 8], strides = [1, 1]} : vector<16x96xf32> to vector<16x8xf32>
    %44 = vector.shape_cast %40 : vector<16x8xf32> to vector<1x16x8xf32>
    %45 = vector.shape_cast %41 : vector<16x8xf32> to vector<1x16x8xf32>
    %46 = vector.shape_cast %42 : vector<16x8xf32> to vector<1x16x8xf32>
    %47 = vector.shape_cast %43 : vector<16x8xf32> to vector<1x16x8xf32>
    %48 = tpu.concatenate %44, %45, %46, %47 in 0 : vector<1x16x8xf32>, vector<1x16x8xf32>, vector<1x16x8xf32>, vector<1x16x8xf32> -> vector<4x16x8xf32>
    %49 = arith.truncf %48 : vector<4x16x8xf32> to vector<4x16x8xbf16>
    %50 = vector.extract_strided_slice %39 {offsets = [0, 32], sizes = [16, 8], strides = [1, 1]} : vector<16x96xf32> to vector<16x8xf32>
    %51 = vector.extract_strided_slice %39 {offsets = [0, 40], sizes = [16, 8], strides = [1, 1]} : vector<16x96xf32> to vector<16x8xf32>
    %52 = vector.extract_strided_slice %39 {offsets = [0, 48], sizes = [16, 8], strides = [1, 1]} : vector<16x96xf32> to vector<16x8xf32>
    %53 = vector.extract_strided_slice %39 {offsets = [0, 56], sizes = [16, 8], strides = [1, 1]} : vector<16x96xf32> to vector<16x8xf32>
    %54 = vector.shape_cast %50 : vector<16x8xf32> to vector<1x16x8xf32>
    %55 = vector.shape_cast %51 : vector<16x8xf32> to vector<1x16x8xf32>
    %56 = vector.shape_cast %52 : vector<16x8xf32> to vector<1x16x8xf32>
    %57 = vector.shape_cast %53 : vector<16x8xf32> to vector<1x16x8xf32>
    %58 = tpu.concatenate %54, %55, %56, %57 in 0 : vector<1x16x8xf32>, vector<1x16x8xf32>, vector<1x16x8xf32>, vector<1x16x8xf32> -> vector<4x16x8xf32>
    %59 = arith.truncf %58 : vector<4x16x8xf32> to vector<4x16x8xbf16>
    %60 = vector.extract_strided_slice %39 {offsets = [0, 64], sizes = [16, 8], strides = [1, 1]} : vector<16x96xf32> to vector<16x8xf32>
    %61 = vector.extract_strided_slice %39 {offsets = [0, 72], sizes = [16, 8], strides = [1, 1]} : vector<16x96xf32> to vector<16x8xf32>
    %62 = vector.extract_strided_slice %39 {offsets = [0, 80], sizes = [16, 8], strides = [1, 1]} : vector<16x96xf32> to vector<16x8xf32>
    %63 = vector.extract_strided_slice %39 {offsets = [0, 88], sizes = [16, 8], strides = [1, 1]} : vector<16x96xf32> to vector<16x8xf32>
    %64 = vector.shape_cast %60 : vector<16x8xf32> to vector<1x16x8xf32>
    %65 = vector.shape_cast %61 : vector<16x8xf32> to vector<1x16x8xf32>
    %66 = vector.shape_cast %62 : vector<16x8xf32> to vector<1x16x8xf32>
    %67 = vector.shape_cast %63 : vector<16x8xf32> to vector<1x16x8xf32>
    %68 = tpu.concatenate %64, %65, %66, %67 in 0 : vector<1x16x8xf32>, vector<1x16x8xf32>, vector<1x16x8xf32>, vector<1x16x8xf32> -> vector<4x16x8xf32>
    %69 = arith.truncf %68 : vector<4x16x8xf32> to vector<4x16x8xbf16>
    "tpu.trace_start"() <{level = 10 : i32, message = "hld,hmd->hlm"}> : () -> ()
    %cst_23 = arith.constant dense<0.000000e+00> : vector<4x16x16xf32>
    %70 = tpu.matmul %49, %59, %cst_23 {dimension_numbers = #tpu.dot_dimension_numbers<[2], [2], [1], [1], [0, 0, 0, 1, 1, 1], [0], [0]>} : vector<4x16x8xbf16>, vector<4x16x8xbf16>, vector<4x16x16xf32> -> vector<4x16x16xf32>
    "tpu.trace_stop"() : () -> ()
    %71 = vector.shape_cast %5 : vector<16x16xf32> to vector<1x16x16xf32>
    %72 = vector.broadcast %71 : vector<1x16x16xf32> to vector<4x16x16xf32>
    %73 = arith.addf %70, %72 : vector<4x16x16xf32>
    %cst_24 = arith.constant dense<0xFF800000> : vector<4x16xf32>
    %74 = vector.multi_reduction <maximumf>, %73, %cst_24 [2] : vector<4x16x16xf32> to vector<4x16xf32>
    %75 = vector.shape_cast %74 : vector<4x16xf32> to vector<4x16x1xf32>
    %76 = vector.broadcast %75 : vector<4x16x1xf32> to vector<4x16x16xf32>
    %77 = arith.subf %73, %76 : vector<4x16x16xf32>
    %78 = math.exp %77 : vector<4x16x16xf32>
    %cst_25 = arith.constant dense<0.000000e+00> : vector<4x16xf32>
    %79 = vector.multi_reduction <add>, %78, %cst_25 [2] : vector<4x16x16xf32> to vector<4x16xf32>
    %80 = vector.shape_cast %79 : vector<4x16xf32> to vector<4x16x1xf32>
    %81 = tpu.reciprocal %80 {approx = true} : vector<4x16x1xf32> -> vector<4x16x1xf32>
    %82 = vector.broadcast %81 : vector<4x16x1xf32> to vector<4x16x16xf32>
    %83 = arith.mulf %78, %82 : vector<4x16x16xf32>
    %84 = arith.truncf %83 : vector<4x16x16xf32> to vector<4x16x16xbf16>
    "tpu.trace_start"() <{level = 10 : i32, message = "hlm,hmd->hld"}> : () -> ()
    %cst_26 = arith.constant dense<0.000000e+00> : vector<4x16x8xf32>
    %85 = tpu.matmul %84, %69, %cst_26 {dimension_numbers = #tpu.dot_dimension_numbers<[2], [1], [1], [2], [0, 0, 0, 1, 1, 2], [0], [0]>} : vector<4x16x16xbf16>, vector<4x16x8xbf16>, vector<4x16x8xf32> -> vector<4x16x8xf32>
    "tpu.trace_stop"() : () -> ()
    %86 = arith.truncf %85 : vector<4x16x8xf32> to vector<4x16x8xbf16>
    %c0_27 = arith.constant 0 : index
    %c0_28 = arith.constant 0 : index
    %c0_29 = arith.constant 0 : index
    %c0_30 = arith.constant 0 : index
    %87 = vector.load %arg9[%c0_27, %c0_28, %c0_29, %c0_30] : memref<1x4x8x32xbf16, #tpu.memory_space<vmem>>, vector<1x4x8x32xbf16>
    %88 = vector.shape_cast %87 : vector<1x4x8x32xbf16> to vector<4x8x32xbf16>
    "tpu.trace_start"() <{level = 10 : i32, message = "hld,hdo->hlo"}> : () -> ()
    %cst_31 = arith.constant dense<0.000000e+00> : vector<4x16x32xf32>
    %89 = tpu.matmul %86, %88, %cst_31 {dimension_numbers = #tpu.dot_dimension_numbers<[2], [1], [1], [2], [0, 0, 0, 1, 1, 2], [0], [0]>} : vector<4x16x8xbf16>, vector<4x8x32xbf16>, vector<4x16x32xf32> -> vector<4x16x32xf32>
    "tpu.trace_stop"() : () -> ()
    %cst_32 = arith.constant dense<0.000000e+00> : vector<16x32xf32>
    %90 = vector.multi_reduction <add>, %89, %cst_32 [0] : vector<4x16x32xf32> to vector<16x32xf32>
    %91 = arith.addf %3, %90 : vector<16x32xf32>
    %c0_33 = arith.constant 0 : index
    %c0_34 = arith.constant 0 : index
    %c0_35 = arith.constant 0 : index
    %92 = vector.load %arg10[%c0_33, %c0_34, %c0_35] : memref<1x1x32xf32, #tpu.memory_space<vmem>>, vector<1x1x32xf32>
    %93 = vector.shape_cast %92 : vector<1x1x32xf32> to vector<1x32xf32>
    %94 = vector.broadcast %93 : vector<1x32xf32> to vector<16x32xf32>
    %95 = arith.addf %91, %94 : vector<16x32xf32>
    %cst_36 = arith.constant dense<0.000000e+00> : vector<16x16xf32>
    %96 = vector.multi_reduction <add>, %83, %cst_36 [0] : vector<4x16x16xf32> to vector<16x16xf32>
    %cst_37 = arith.constant 4.000000e+00 : f32
    %97 = vector.broadcast %cst_37 : f32 to vector<16x16xf32>
    %98 = arith.divf %96, %97 : vector<16x16xf32>
    %cst_38 = arith.constant dense<0.000000e+00> : vector<2x16xf32>
    %99 = tpu.matmul %4, %98, %cst_38 {dimension_numbers = #tpu.dot_dimension_numbers<[1], [0], [0], [1], [0, 0, 1, 1], [], []>} : vector<2x16xf32>, vector<16x16xf32>, vector<2x16xf32> -> vector<2x16xf32>
    %c0_39 = arith.constant 0 : index
    %c0_40 = arith.constant 0 : index
    %100 = vector.load %arg22[%c0_39, %c0_40] : memref<2x8xf32, #tpu.memory_space<vmem>>, vector<2x8xf32>
    %c0_41 = arith.constant 0 : index
    %c0_42 = arith.constant 0 : index
    %101 = vector.load %arg4[%c0_41, %c0_42] : memref<16x8xf32, #tpu.memory_space<vmem>>, vector<16x8xf32>
    %cst_43 = arith.constant dense<0.000000e+00> : vector<2x8xf32>
    %102 = tpu.matmul %99, %101, %cst_43 {dimension_numbers = #tpu.dot_dimension_numbers<[1], [0], [0], [1], [0, 0, 1, 1], [], []>} : vector<2x16xf32>, vector<16x8xf32>, vector<2x8xf32> -> vector<2x8xf32>
    %103 = arith.addf %100, %102 : vector<2x8xf32>
    %c0_44 = arith.constant 0 : index
    %c0_45 = arith.constant 0 : index
    %104 = vector.load %arg22[%c0_44, %c0_45] : memref<2x8xf32, #tpu.memory_space<vmem>>, vector<2x8xf32>
    tpu.vector_store %arg22[%c0_44, %c0_45], %103 {strides = array<i32>} : memref<2x8xf32, #tpu.memory_space<vmem>>, vector<2x8xf32>,
    %c0_46 = arith.constant 0 : index
    %c0_47 = arith.constant 0 : index
    %c0_48 = arith.constant 0 : index
    %105 = vector.load %arg11[%c0_46, %c0_47, %c0_48] : memref<1x1x32xf32, #tpu.memory_space<vmem>>, vector<1x1x32xf32>
    %106 = vector.shape_cast %105 : vector<1x1x32xf32> to vector<1x32xf32>
    %c0_49 = arith.constant 0 : index
    %c0_50 = arith.constant 0 : index
    %c0_51 = arith.constant 0 : index
    %107 = vector.load %arg12[%c0_49, %c0_50, %c0_51] : memref<1x1x32xf32, #tpu.memory_space<vmem>>, vector<1x1x32xf32>
    %108 = vector.shape_cast %107 : vector<1x1x32xf32> to vector<1x32xf32>
    %cst_52 = arith.constant dense<0.000000e+00> : vector<16xf32>
    %109 = vector.multi_reduction <add>, %95, %cst_52 [1] : vector<16x32xf32> to vector<16xf32>
    %110 = vector.shape_cast %109 : vector<16xf32> to vector<16x1xf32>
    %cst_53 = arith.constant 3.200000e+01 : f32
    %111 = vector.broadcast %cst_53 : f32 to vector<16x1xf32>
    %112 = arith.divf %110, %111 : vector<16x1xf32>
    %113 = vector.broadcast %112 : vector<16x1xf32> to vector<16x32xf32>
    %114 = arith.subf %95, %113 : vector<16x32xf32>
    %115 = arith.mulf %114, %114 : vector<16x32xf32>
    %cst_54 = arith.constant dense<0.000000e+00> : vector<16xf32>
    %116 = vector.multi_reduction <add>, %115, %cst_54 [1] : vector<16x32xf32> to vector<16xf32>
    %117 = vector.shape_cast %116 : vector<16xf32> to vector<16x1xf32>
    %cst_55 = arith.constant 3.200000e+01 : f32
    %118 = vector.broadcast %cst_55 : f32 to vector<16x1xf32>
    %119 = arith.divf %117, %118 : vector<16x1xf32>
    %120 = vector.broadcast %112 : vector<16x1xf32> to vector<16x32xf32>
    %121 = arith.subf %95, %120 : vector<16x32xf32>
    %cst_56 = arith.constant 9.99999974E-6 : f32
    %122 = vector.broadcast %cst_56 : f32 to vector<16x1xf32>
    %123 = arith.addf %119, %122 : vector<16x1xf32>
    %124 = math.rsqrt %123 : vector<16x1xf32>
    %125 = vector.broadcast %124 : vector<16x1xf32> to vector<16x32xf32>
    %126 = arith.mulf %121, %125 : vector<16x32xf32>
    %127 = vector.broadcast %106 : vector<1x32xf32> to vector<16x32xf32>
    %128 = arith.mulf %126, %127 : vector<16x32xf32>
    %129 = vector.broadcast %108 : vector<1x32xf32> to vector<16x32xf32>
    %130 = arith.addf %128, %129 : vector<16x32xf32>
    %131 = arith.truncf %130 : vector<16x32xf32> to vector<16x32xbf16>
    %c0_57 = arith.constant 0 : index
    %c0_58 = arith.constant 0 : index
    %c0_59 = arith.constant 0 : index
    %132 = vector.load %arg13[%c0_57, %c0_58, %c0_59] : memref<1x32x128xbf16, #tpu.memory_space<vmem>>, vector<1x32x128xbf16>
    %133 = vector.shape_cast %132 : vector<1x32x128xbf16> to vector<32x128xbf16>
    %cst_60 = arith.constant dense<0.000000e+00> : vector<16x128xf32>
    %134 = tpu.matmul %131, %133, %cst_60 {dimension_numbers = #tpu.dot_dimension_numbers<[1], [0], [0], [1], [0, 0, 1, 1], [], []>} : vector<16x32xbf16>, vector<32x128xbf16>, vector<16x128xf32> -> vector<16x128xf32>
    %c0_61 = arith.constant 0 : index
    %c0_62 = arith.constant 0 : index
    %c0_63 = arith.constant 0 : index
    %135 = vector.load %arg14[%c0_61, %c0_62, %c0_63] : memref<1x1x128xf32, #tpu.memory_space<vmem>>, vector<1x1x128xf32>
    %136 = vector.shape_cast %135 : vector<1x1x128xf32> to vector<1x128xf32>
    %137 = vector.broadcast %136 : vector<1x128xf32> to vector<16x128xf32>
    %138 = arith.addf %134, %137 : vector<16x128xf32>
    %cst_64 = arith.constant 1.702000e+00 : f32
    %139 = vector.broadcast %cst_64 : f32 to vector<16x128xf32>
    %140 = arith.mulf %139, %138 : vector<16x128xf32>
    %141 = arith.negf %140 : vector<16x128xf32>
    %142 = math.exp %141 : vector<16x128xf32>
    %cst_65 = arith.constant 1.000000e+00 : f32
    %143 = vector.broadcast %cst_65 : f32 to vector<16x128xf32>
    %144 = arith.addf %143, %142 : vector<16x128xf32>
    %145 = arith.divf %143, %144 : vector<16x128xf32>
    %146 = arith.mulf %138, %145 : vector<16x128xf32>
    %147 = arith.truncf %146 : vector<16x128xf32> to vector<16x128xbf16>
    %c0_66 = arith.constant 0 : index
    %c0_67 = arith.constant 0 : index
    %c0_68 = arith.constant 0 : index
    %148 = vector.load %arg15[%c0_66, %c0_67, %c0_68] : memref<1x128x32xbf16, #tpu.memory_space<vmem>>, vector<1x128x32xbf16>
    %149 = vector.shape_cast %148 : vector<1x128x32xbf16> to vector<128x32xbf16>
    %cst_69 = arith.constant dense<0.000000e+00> : vector<16x32xf32>
    %150 = tpu.matmul %147, %149, %cst_69 {dimension_numbers = #tpu.dot_dimension_numbers<[1], [0], [0], [1], [0, 0, 1, 1], [], []>} : vector<16x128xbf16>, vector<128x32xbf16>, vector<16x32xf32> -> vector<16x32xf32>
    %c0_70 = arith.constant 0 : index
    %c0_71 = arith.constant 0 : index
    %c0_72 = arith.constant 0 : index
    %151 = vector.load %arg16[%c0_70, %c0_71, %c0_72] : memref<1x1x32xf32, #tpu.memory_space<vmem>>, vector<1x1x32xf32>
    %152 = vector.shape_cast %151 : vector<1x1x32xf32> to vector<1x32xf32>
    %153 = vector.broadcast %152 : vector<1x32xf32> to vector<16x32xf32>
    %154 = arith.addf %150, %153 : vector<16x32xf32>
    %155 = arith.addf %95, %154 : vector<16x32xf32>
    %c0_73 = arith.constant 0 : index
    %c0_74 = arith.constant 0 : index
    %156 = vector.load %arg21[%c0_73, %c0_74] : memref<16x32xf32, #tpu.memory_space<vmem>>, vector<16x32xf32>
    tpu.vector_store %arg21[%c0_73, %c0_74], %155 {strides = array<i32>} : memref<16x32xf32, #tpu.memory_space<vmem>>, vector<16x32xf32>,
    %c1_i32 = arith.constant 1 : i32
    %157 = arith.cmpi eq, %arg0, %c1_i32 : i32
    %158 = arith.extui %157 : i1 to i32
    %c0_i32_75 = arith.constant 0 : i32
    %159 = arith.cmpi ne, %158, %c0_i32_75 : i32
    scf.if %159 {
      %c0_76 = arith.constant 0 : index
      %c0_77 = arith.constant 0 : index
      %160 = vector.load %arg17[%c0_76, %c0_77] : memref<1x32xf32, #tpu.memory_space<vmem>>, vector<1x32xf32>
      %c0_78 = arith.constant 0 : index
      %c0_79 = arith.constant 0 : index
      %161 = vector.load %arg18[%c0_78, %c0_79] : memref<1x32xf32, #tpu.memory_space<vmem>>, vector<1x32xf32>
      %cst_80 = arith.constant dense<0.000000e+00> : vector<16xf32>
      %162 = vector.multi_reduction <add>, %155, %cst_80 [1] : vector<16x32xf32> to vector<16xf32>
      %163 = vector.shape_cast %162 : vector<16xf32> to vector<16x1xf32>
      %cst_81 = arith.constant 3.200000e+01 : f32
      %164 = vector.broadcast %cst_81 : f32 to vector<16x1xf32>
      %165 = arith.divf %163, %164 : vector<16x1xf32>
      %166 = vector.broadcast %165 : vector<16x1xf32> to vector<16x32xf32>
      %167 = arith.subf %155, %166 : vector<16x32xf32>
      %168 = arith.mulf %167, %167 : vector<16x32xf32>
      %cst_82 = arith.constant dense<0.000000e+00> : vector<16xf32>
      %169 = vector.multi_reduction <add>, %168, %cst_82 [1] : vector<16x32xf32> to vector<16xf32>
      %170 = vector.shape_cast %169 : vector<16xf32> to vector<16x1xf32>
      %cst_83 = arith.constant 3.200000e+01 : f32
      %171 = vector.broadcast %cst_83 : f32 to vector<16x1xf32>
      %172 = arith.divf %170, %171 : vector<16x1xf32>
      %173 = vector.broadcast %165 : vector<16x1xf32> to vector<16x32xf32>
      %174 = arith.subf %155, %173 : vector<16x32xf32>
      %cst_84 = arith.constant 9.99999974E-6 : f32
      %175 = vector.broadcast %cst_84 : f32 to vector<16x1xf32>
      %176 = arith.addf %172, %175 : vector<16x1xf32>
      %177 = math.rsqrt %176 : vector<16x1xf32>
      %178 = vector.broadcast %177 : vector<16x1xf32> to vector<16x32xf32>
      %179 = arith.mulf %174, %178 : vector<16x32xf32>
      %180 = vector.broadcast %160 : vector<1x32xf32> to vector<16x32xf32>
      %181 = arith.mulf %179, %180 : vector<16x32xf32>
      %182 = vector.broadcast %161 : vector<1x32xf32> to vector<16x32xf32>
      %183 = arith.addf %181, %182 : vector<16x32xf32>
      %cst_85 = arith.constant dense<0.000000e+00> : vector<2x32xf32>
      %184 = tpu.matmul %4, %183, %cst_85 {dimension_numbers = #tpu.dot_dimension_numbers<[1], [0], [0], [1], [0, 0, 1, 1], [], []>} : vector<2x16xf32>, vector<16x32xf32>, vector<2x32xf32> -> vector<2x32xf32>
      %185 = arith.truncf %184 : vector<2x32xf32> to vector<2x32xbf16>
      %c0_86 = arith.constant 0 : index
      %c0_87 = arith.constant 0 : index
      %186 = vector.load %arg19[%c0_86, %c0_87] : memref<32x128xbf16, #tpu.memory_space<vmem>>, vector<32x128xbf16>
      %cst_88 = arith.constant dense<0.000000e+00> : vector<2x128xf32>
      %187 = tpu.matmul %185, %186, %cst_88 {dimension_numbers = #tpu.dot_dimension_numbers<[1], [0], [0], [1], [0, 0, 1, 1], [], []>} : vector<2x32xbf16>, vector<32x128xbf16>, vector<2x128xf32> -> vector<2x128xf32>
      %c0_89 = arith.constant 0 : index
      %c0_90 = arith.constant 0 : index
      %188 = vector.load %arg22[%c0_89, %c0_90] : memref<2x8xf32, #tpu.memory_space<vmem>>, vector<2x8xf32>
      %cst_91 = arith.constant 5.000000e-01 : f32
      %189 = vector.broadcast %cst_91 : f32 to vector<2x8xf32>
      %190 = arith.mulf %188, %189 : vector<2x8xf32>
      %cst_92 = arith.constant dense<0.000000e+00> : vector<2xf32>
      %191 = vector.multi_reduction <add>, %190, %cst_92 [1] : vector<2x8xf32> to vector<2xf32>
      %192 = vector.shape_cast %191 : vector<2xf32> to vector<2x1xf32>
      %193 = vector.broadcast %192 : vector<2x1xf32> to vector<2x8xf32>
      %194 = arith.divf %190, %193 : vector<2x8xf32>
      %cst_93 = arith.constant 0.000000e+00 : f32
      %195 = vector.broadcast %cst_93 : f32 to vector<2x120xf32>
      %196 = tpu.concatenate %194, %195 in 1 : vector<2x8xf32>, vector<2x120xf32> -> vector<2x128xf32>
      %197 = tpu.concatenate %187, %196 in 1 : vector<2x128xf32>, vector<2x128xf32> -> vector<2x256xf32>
      %c0_94 = arith.constant 0 : index
      %c0_95 = arith.constant 0 : index
      %198 = vector.load %arg20[%c0_94, %c0_95] : memref<2x256xf32, #tpu.memory_space<vmem>>, vector<2x256xf32>
      tpu.vector_store %arg20[%c0_94, %c0_95], %197 {strides = array<i32>} : memref<2x256xf32, #tpu.memory_space<vmem>>, vector<2x256xf32>,
    } else {
    }
    return
  }
  func.func @transform_0(%arg0: i32) -> (i32, i32) {
    %c0_i32 = arith.constant 0 : i32
    %c0_i32_0 = arith.constant 0 : i32
    %c0_i32_1 = arith.constant 0 : i32
    return %c0_i32, %c0_i32_0 : i32, i32
  }
  func.func @transform_1(%arg0: i32) -> (i32, i32) {
    %c0_i32 = arith.constant 0 : i32
    %c0_i32_0 = arith.constant 0 : i32
    %c0_i32_1 = arith.constant 0 : i32
    return %c0_i32, %c0_i32_0 : i32, i32
  }
  func.func @transform_2(%arg0: i32) -> (i32, i32) {
    %c0_i32 = arith.constant 0 : i32
    %c0_i32_0 = arith.constant 0 : i32
    %c0_i32_1 = arith.constant 0 : i32
    return %c0_i32, %c0_i32_0 : i32, i32
  }
  func.func @transform_3(%arg0: i32) -> (i32, i32) {
    %c0_i32 = arith.constant 0 : i32
    %c0_i32_0 = arith.constant 0 : i32
    %c0_i32_1 = arith.constant 0 : i32
    return %c0_i32, %c0_i32_0 : i32, i32
  }
  func.func @transform_4(%arg0: i32) -> (i32, i32, i32) {
    %c0_i32 = arith.constant 0 : i32
    %c0_i32_0 = arith.constant 0 : i32
    %c0_i32_1 = arith.constant 0 : i32
    return %arg0, %c0_i32, %c0_i32_0 : i32, i32, i32
  }
  func.func @transform_5(%arg0: i32) -> (i32, i32, i32) {
    %c0_i32 = arith.constant 0 : i32
    %c0_i32_0 = arith.constant 0 : i32
    %c0_i32_1 = arith.constant 0 : i32
    return %arg0, %c0_i32, %c0_i32_0 : i32, i32, i32
  }
  func.func @transform_6(%arg0: i32) -> (i32, i32, i32) {
    %c0_i32 = arith.constant 0 : i32
    %c0_i32_0 = arith.constant 0 : i32
    %c0_i32_1 = arith.constant 0 : i32
    return %arg0, %c0_i32, %c0_i32_0 : i32, i32, i32
  }
  func.func @transform_7(%arg0: i32) -> (i32, i32, i32) {
    %c0_i32 = arith.constant 0 : i32
    %c0_i32_0 = arith.constant 0 : i32
    %c0_i32_1 = arith.constant 0 : i32
    return %arg0, %c0_i32, %c0_i32_0 : i32, i32, i32
  }
  func.func @transform_8(%arg0: i32) -> (i32, i32, i32, i32) {
    %c0_i32 = arith.constant 0 : i32
    %c0_i32_0 = arith.constant 0 : i32
    %c0_i32_1 = arith.constant 0 : i32
    %c0_i32_2 = arith.constant 0 : i32
    return %arg0, %c0_i32, %c0_i32_0, %c0_i32_1 : i32, i32, i32, i32
  }
  func.func @transform_9(%arg0: i32) -> (i32, i32, i32) {
    %c0_i32 = arith.constant 0 : i32
    %c0_i32_0 = arith.constant 0 : i32
    %c0_i32_1 = arith.constant 0 : i32
    return %arg0, %c0_i32, %c0_i32_0 : i32, i32, i32
  }
  func.func @transform_10(%arg0: i32) -> (i32, i32, i32) {
    %c0_i32 = arith.constant 0 : i32
    %c0_i32_0 = arith.constant 0 : i32
    %c0_i32_1 = arith.constant 0 : i32
    return %arg0, %c0_i32, %c0_i32_0 : i32, i32, i32
  }
  func.func @transform_11(%arg0: i32) -> (i32, i32, i32) {
    %c0_i32 = arith.constant 0 : i32
    %c0_i32_0 = arith.constant 0 : i32
    %c0_i32_1 = arith.constant 0 : i32
    return %arg0, %c0_i32, %c0_i32_0 : i32, i32, i32
  }
  func.func @transform_12(%arg0: i32) -> (i32, i32, i32) {
    %c0_i32 = arith.constant 0 : i32
    %c0_i32_0 = arith.constant 0 : i32
    %c0_i32_1 = arith.constant 0 : i32
    return %arg0, %c0_i32, %c0_i32_0 : i32, i32, i32
  }
  func.func @transform_13(%arg0: i32) -> (i32, i32, i32) {
    %c0_i32 = arith.constant 0 : i32
    %c0_i32_0 = arith.constant 0 : i32
    %c0_i32_1 = arith.constant 0 : i32
    return %arg0, %c0_i32, %c0_i32_0 : i32, i32, i32
  }
  func.func @transform_14(%arg0: i32) -> (i32, i32, i32) {
    %c0_i32 = arith.constant 0 : i32
    %c0_i32_0 = arith.constant 0 : i32
    %c0_i32_1 = arith.constant 0 : i32
    return %arg0, %c0_i32, %c0_i32_0 : i32, i32, i32
  }
  func.func @transform_15(%arg0: i32) -> (i32, i32, i32) {
    %c0_i32 = arith.constant 0 : i32
    %c0_i32_0 = arith.constant 0 : i32
    %c0_i32_1 = arith.constant 0 : i32
    return %arg0, %c0_i32, %c0_i32_0 : i32, i32, i32
  }
  func.func @transform_16(%arg0: i32) -> (i32, i32) {
    %c0_i32 = arith.constant 0 : i32
    %c0_i32_0 = arith.constant 0 : i32
    %c0_i32_1 = arith.constant 0 : i32
    return %c0_i32, %c0_i32_0 : i32, i32
  }
  func.func @transform_17(%arg0: i32) -> (i32, i32) {
    %c0_i32 = arith.constant 0 : i32
    %c0_i32_0 = arith.constant 0 : i32
    %c0_i32_1 = arith.constant 0 : i32
    return %c0_i32, %c0_i32_0 : i32, i32
  }
  func.func @transform_18(%arg0: i32) -> (i32, i32) {
    %c0_i32 = arith.constant 0 : i32
    %c0_i32_0 = arith.constant 0 : i32
    %c0_i32_1 = arith.constant 0 : i32
    return %c0_i32, %c0_i32_0 : i32, i32
  }
  func.func @transform_19(%arg0: i32) -> (i32, i32) {
    %c0_i32 = arith.constant 0 : i32
    %c0_i32_0 = arith.constant 0 : i32
    %c0_i32_1 = arith.constant 0 : i32
    return %c0_i32, %c0_i32_0 : i32, i32
  }
}

</mosaic_0001>

<llo_original>
// kernel: exposed_text_encoder.1
$region0: #{exposed_text_encoder.1}
  #allocation0 [shape = 'u32[]', space=smem, size = 0x4, offset = 0x4, fixed_abs, tag = 'smem constant byte address 0x4 - core index']
  #allocation1 [shape = 'u32[144,128]{1,0:T(1,128)}', space=vmem, size = 0x12000, scoped, tag = 'internal scratch']
  #allocation2 [shape = 'f32[16,32]{1,0:T(8,128)}', space=vmem, size = 0x2000, scoped, tag = 'scratch operand']
  #allocation3 [shape = 'f32[2,8]{1,0:T(2,128)}', space=vmem, size = 0x400, scoped, tag = 'scratch operand']
  %s0 = inlined_call_operand.vmem [shape: f32[16,32], index: 0, kind: input, shape index: {}]
  %s1 = inlined_call_operand.vmem [shape: f32[2,16], index: 1, kind: input, shape index: {}]
  %s2 = inlined_call_operand.vmem [shape: f32[16,16], index: 2, kind: input, shape index: {}]
  %s3 = inlined_call_operand.vmem [shape: f32[16,8], index: 3, kind: input, shape index: {}]
  %s4 = inlined_call_operand.vmem [shape: f32[2,1,32], index: 4, kind: input, shape index: {}]
  %s5 = inlined_call_operand.vmem [shape: f32[2,1,32], index: 5, kind: input, shape index: {}]
  %s6 = inlined_call_operand.vmem [shape: bf16[2,32,96], index: 6, kind: input, shape index: {}]
  %s7 = inlined_call_operand.vmem [shape: f32[2,1,96], index: 7, kind: input, shape index: {}]
  %s8 = inlined_call_operand.vmem [shape: bf16[2,4,8,32], index: 8, kind: input, shape index: {}]
  %s9 = inlined_call_operand.vmem [shape: f32[2,1,32], index: 9, kind: input, shape index: {}]
  %s10 = inlined_call_operand.vmem [shape: f32[2,1,32], index: 10, kind: input, shape index: {}]
  %s11 = inlined_call_operand.vmem [shape: f32[2,1,32], index: 11, kind: input, shape index: {}]
  %s12 = inlined_call_operand.vmem [shape: bf16[2,32,128], index: 12, kind: input, shape index: {}]
  %s13 = inlined_call_operand.vmem [shape: f32[2,1,128], index: 13, kind: input, shape index: {}]
  %s14 = inlined_call_operand.vmem [shape: bf16[2,128,32], index: 14, kind: input, shape index: {}]
  %s15 = inlined_call_operand.vmem [shape: f32[2,1,32], index: 15, kind: input, shape index: {}]
  %s16 = inlined_call_operand.vmem [shape: f32[1,32], index: 16, kind: input, shape index: {}]
  %s17 = inlined_call_operand.vmem [shape: f32[1,32], index: 17, kind: input, shape index: {}]
  %s18 = inlined_call_operand.vmem [shape: bf16[32,128], index: 18, kind: input, shape index: {}]
  %s19 = inlined_call_operand.vmem [shape: f32[2,256], index: 19, kind: output, shape index: {}]
  %s20 = sld [smem:[#allocation0]]
  $region117: #{exposed_text_encoder.1} parent=0
    _
  %s22 = ssub.s32 1, %s20
  %s23 = scalar_select 0, %s22, %s20
  loop: start=0, step=1, limit=4
  $region2: #{exposed_text_encoder.1} parent=0 // loop_pre_header
    _
  $region3: #{exposed_text_encoder.1} parent=0 // loop_header
    %s25 = sphi 0, %s29
    %p26 = scmp.ge.s32.totalorder %s25, 4
    %s33 = sphi 0, %s33
    %s35 = sphi 0, %s33
    %s36 = sphi 0, %s35
    %s50 = sphi 0, %s36
    %s54 = sphi 0, %s54
    %s56 = sphi 0, %s54
    %s57 = sphi 0, %s56
    %s71 = sphi 0, %s57
    %s75 = sphi 0, %s75
    %s77 = sphi 0, %s75
    %s78 = sphi 0, %s77
    %s92 = sphi 0, %s78
    %s96 = sphi 0, %s96
    %s98 = sphi 0, %s96
    %s99 = sphi 0, %s98
    %s113 = sphi 0, %s99
    %s119 = sphi 0, %s121
    %s122 = sphi 0, %s119
    %s123 = sphi 0, %s122
    %s139 = sphi 0, %s123
    %s145 = sphi 0, %s147
    %s148 = sphi 0, %s145
    %s149 = sphi 0, %s148
    %s165 = sphi 0, %s149
    %s171 = sphi 0, %s173
    %s174 = sphi 0, %s171
    %s175 = sphi 0, %s174
    %s191 = sphi 0, %s175
    %s197 = sphi 0, %s199
    %s200 = sphi 0, %s197
    %s201 = sphi 0, %s200
    %s217 = sphi 0, %s201
    %s223 = sphi 0, %s225
    %s226 = sphi 0, %s223
    %s227 = sphi 0, %s226
    %s243 = sphi 0, %s227
    %s249 = sphi 0, %s251
    %s252 = sphi 0, %s249
    %s253 = sphi 0, %s252
    %s269 = sphi 0, %s253
    %s275 = sphi 0, %s277
    %s278 = sphi 0, %s275
    %s279 = sphi 0, %s278
    %s295 = sphi 0, %s279
    %s301 = sphi 0, %s303
    %s304 = sphi 0, %s301
    %s305 = sphi 0, %s304
    %s321 = sphi 0, %s305
    %s327 = sphi 0, %s329
    %s330 = sphi 0, %s327
    %s331 = sphi 0, %s330
    %s347 = sphi 0, %s331
    %s353 = sphi 0, %s355
    %s356 = sphi 0, %s353
    %s357 = sphi 0, %s356
    %s373 = sphi 0, %s357
    %s379 = sphi 0, %s381
    %s382 = sphi 0, %s379
    %s383 = sphi 0, %s382
    %s399 = sphi 0, %s383
    %s405 = sphi 0, %s407
    %s408 = sphi 0, %s405
    %s409 = sphi 0, %s408
    %s425 = sphi 0, %s409
    %s429 = sphi 0, %s429
    %s431 = sphi 0, %s429
    %s432 = sphi 0, %s431
    %s446 = sphi 0, %s432
    %s450 = sphi 0, %s450
    %s452 = sphi 0, %s450
    %s453 = sphi 0, %s452
    %s467 = sphi 0, %s453
    %s471 = sphi 0, %s471
    %s473 = sphi 0, %s471
    %s474 = sphi 0, %s473
    %s488 = sphi 0, %s474
    %s492 = sphi 0, %s492
    %s494 = sphi 0, %s492
    %s495 = sphi 0, %s494
    %s509 = sphi 0, %s495
  $region4: #{exposed_text_encoder.1} parent=0 // loop_header_branch
    %28 = sbr.rel (%p26) target = $region8
  $region5: #{exposed_text_encoder.1} parent=0 // loop_body
    %s30 = ssub.s32 %s25, 1
    %s31 = ssub.s32 %s25, 2
    %s32 = sadd.s32 %s25, 1
    %s34 = sadd.s32 %s33, 1
    %p37 = scmp.eq.s32.totalorder %s25, 1
    %p38 = scmp.ne.s32.totalorder %s33, %s35
    %p39 = scmp.eq.s32.totalorder %s25, 0
    %p40 = por %p38, %p39
    %p41 = scmp.ne.s32.totalorder %s33, %s35
    %p42 = scmp.eq.s32.totalorder %s30, 1
    %p43 = por %p41, %p42
    %p44 = scmp.ne.s32.totalorder %s35, %s36
    %p45 = scmp.eq.s32.totalorder %s30, 0
    %p46 = por %p44, %p45
    %p47 = scmp.ne.s32.totalorder %s35, %s36
    %p48 = scmp.eq.s32.totalorder %s31, 1
    %p49 = por %p47, %p48
    %p51 = scmp.ne.s32.totalorder %s36, %s50
    %p52 = scmp.eq.s32.totalorder %s31, 0
    %p53 = por %p51, %p52
    %s55 = sadd.s32 %s54, 1
    %p58 = scmp.eq.s32.totalorder %s25, 1
    %p59 = scmp.ne.s32.totalorder %s54, %s56
    %p60 = scmp.eq.s32.totalorder %s25, 0
    %p61 = por %p59, %p60
    %p62 = scmp.ne.s32.totalorder %s54, %s56
    %p63 = scmp.eq.s32.totalorder %s30, 1
    %p64 = por %p62, %p63
    %p65 = scmp.ne.s32.totalorder %s56, %s57
    %p66 = scmp.eq.s32.totalorder %s30, 0
    %p67 = por %p65, %p66
    %p68 = scmp.ne.s32.totalorder %s56, %s57
    %p69 = scmp.eq.s32.totalorder %s31, 1
    %p70 = por %p68, %p69
    %p72 = scmp.ne.s32.totalorder %s57, %s71
    %p73 = scmp.eq.s32.totalorder %s31, 0
    %p74 = por %p72, %p73
    %s76 = sadd.s32 %s75, 1
    %p79 = scmp.eq.s32.totalorder %s25, 1
    %p80 = scmp.ne.s32.totalorder %s75, %s77
    %p81 = scmp.eq.s32.totalorder %s25, 0
    %p82 = por %p80, %p81
    %p83 = scmp.ne.s32.totalorder %s75, %s77
    %p84 = scmp.eq.s32.totalorder %s30, 1
    %p85 = por %p83, %p84
    %p86 = scmp.ne.s32.totalorder %s77, %s78
    %p87 = scmp.eq.s32.totalorder %s30, 0
    %p88 = por %p86, %p87
    %p89 = scmp.ne.s32.totalorder %s77, %s78
    %p90 = scmp.eq.s32.totalorder %s31, 1
    %p91 = por %p89, %p90
    %p93 = scmp.ne.s32.totalorder %s78, %s92
    %p94 = scmp.eq.s32.totalorder %s31, 0
    %p95 = por %p93, %p94
    %s97 = sadd.s32 %s96, 1
    %p100 = scmp.eq.s32.totalorder %s25, 1
    %p101 = scmp.ne.s32.totalorder %s96, %s98
    %p102 = scmp.eq.s32.totalorder %s25, 0
    %p103 = por %p101, %p102
    %p104 = scmp.ne.s32.totalorder %s96, %s98
    %p105 = scmp.eq.s32.totalorder %s30, 1
    %p106 = por %p104, %p105
    %p107 = scmp.ne.s32.totalorder %s98, %s99
    %p108 = scmp.eq.s32.totalorder %s30, 0
    %p109 = por %p107, %p108
    %p110 = scmp.ne.s32.totalorder %s98, %s99
    %p111 = scmp.eq.s32.totalorder %s31, 1
    %p112 = por %p110, %p111
    %p114 = scmp.ne.s32.totalorder %s99, %s113
    %p115 = scmp.eq.s32.totalorder %s31, 0
    %p116 = por %p114, %p115
    %s117 = ssub.s32 %s25, %s32
    %p118 = scmp.eq.s32.totalorder %s117, 0
    %s120 = sadd.s32 %s119, 1
    %s121 = scalar_select %p118, %s119, %s120
    %p124 = pneg %p118
    %p125 = scmp.eq.s32.totalorder %s25, 1
    %p126 = por %p124, %p125
    %p127 = scmp.ne.s32.totalorder %s119, %s122
    %p128 = scmp.eq.s32.totalorder %s25, 0
    %p129 = por %p127, %p128
    %p130 = scmp.ne.s32.totalorder %s119, %s122
    %p131 = scmp.eq.s32.totalorder %s30, 1
    %p132 = por %p130, %p131
    %p133 = scmp.ne.s32.totalorder %s122, %s123
    %p134 = scmp.eq.s32.totalorder %s30, 0
    %p135 = por %p133, %p134
    %p136 = scmp.ne.s32.totalorder %s122, %s123
    %p137 = scmp.eq.s32.totalorder %s31, 1
    %p138 = por %p136, %p137
    %p140 = scmp.ne.s32.totalorder %s123, %s139
    %p141 = scmp.eq.s32.totalorder %s31, 0
    %p142 = por %p140, %p141
    %s143 = ssub.s32 %s25, %s32
    %p144 = scmp.eq.s32.totalorder %s143, 0
    %s146 = sadd.s32 %s145, 1
    %s147 = scalar_select %p144, %s145, %s146
    %p150 = pneg %p144
    %p151 = scmp.eq.s32.totalorder %s25, 1
    %p152 = por %p150, %p151
    %p153 = scmp.ne.s32.totalorder %s145, %s148
    %p154 = scmp.eq.s32.totalorder %s25, 0
    %p155 = por %p153, %p154
    %p156 = scmp.ne.s32.totalorder %s145, %s148
    %p157 = scmp.eq.s32.totalorder %s30, 1
    %p158 = por %p156, %p157
    %p159 = scmp.ne.s32.totalorder %s148, %s149
    %p160 = scmp.eq.s32.totalorder %s30, 0
    %p161 = por %p159, %p160
    %p162 = scmp.ne.s32.totalorder %s148, %s149
    %p163 = scmp.eq.s32.totalorder %s31, 1
    %p164 = por %p162, %p163
    %p166 = scmp.ne.s32.totalorder %s149, %s165
    %p167 = scmp.eq.s32.totalorder %s31, 0
    %p168 = por %p166, %p167
    %s169 = ssub.s32 %s25, %s32
    %p170 = scmp.eq.s32.totalorder %s169, 0
    %s172 = sadd.s32 %s171, 1
    %s173 = scalar_select %p170, %s171, %s172
    %p176 = pneg %p170
    %p177 = scmp.eq.s32.totalorder %s25, 1
    %p178 = por %p176, %p177
    %p179 = scmp.ne.s32.totalorder %s171, %s174
    %p180 = scmp.eq.s32.totalorder %s25, 0
    %p181 = por %p179, %p180
    %p182 = scmp.ne.s32.totalorder %s171, %s174
    %p183 = scmp.eq.s32.totalorder %s30, 1
    %p184 = por %p182, %p183
    %p185 = scmp.ne.s32.totalorder %s174, %s175
    %p186 = scmp.eq.s32.totalorder %s30, 0
    %p187 = por %p185, %p186
    %p188 = scmp.ne.s32.totalorder %s174, %s175
    %p189 = scmp.eq.s32.totalorder %s31, 1
    %p190 = por %p188, %p189
    %p192 = scmp.ne.s32.totalorder %s175, %s191
    %p193 = scmp.eq.s32.totalorder %s31, 0
    %p194 = por %p192, %p193
    %s195 = ssub.s32 %s25, %s32
    %p196 = scmp.eq.s32.totalorder %s195, 0
    %s198 = sadd.s32 %s197, 1
    %s199 = scalar_select %p196, %s197, %s198
    %p202 = pneg %p196
    %p203 = scmp.eq.s32.totalorder %s25, 1
    %p204 = por %p202, %p203
    %p205 = scmp.ne.s32.totalorder %s197, %s200
    %p206 = scmp.eq.s32.totalorder %s25, 0
    %p207 = por %p205, %p206
    %p208 = scmp.ne.s32.totalorder %s197, %s200
    %p209 = scmp.eq.s32.totalorder %s30, 1
    %p210 = por %p208, %p209
    %p211 = scmp.ne.s32.totalorder %s200, %s201
    %p212 = scmp.eq.s32.totalorder %s30, 0
    %p213 = por %p211, %p212
    %p214 = scmp.ne.s32.totalorder %s200, %s201
    %p215 = scmp.eq.s32.totalorder %s31, 1
    %p216 = por %p214, %p215
    %p218 = scmp.ne.s32.totalorder %s201, %s217
    %p219 = scmp.eq.s32.totalorder %s31, 0
    %p220 = por %p218, %p219
    %s221 = ssub.s32 %s25, %s32
    %p222 = scmp.eq.s32.totalorder %s221, 0
    %s224 = sadd.s32 %s223, 1
    %s225 = scalar_select %p222, %s223, %s224
    %p228 = pneg %p222
    %p229 = scmp.eq.s32.totalorder %s25, 1
    %p230 = por %p228, %p229
    %p231 = scmp.ne.s32.totalorder %s223, %s226
    %p232 = scmp.eq.s32.totalorder %s25, 0
    %p233 = por %p231, %p232
    %p234 = scmp.ne.s32.totalorder %s223, %s226
    %p235 = scmp.eq.s32.totalorder %s30, 1
    %p236 = por %p234, %p235
    %p237 = scmp.ne.s32.totalorder %s226, %s227
    %p238 = scmp.eq.s32.totalorder %s30, 0
    %p239 = por %p237, %p238
    %p240 = scmp.ne.s32.totalorder %s226, %s227
    %p241 = scmp.eq.s32.totalorder %s31, 1
    %p242 = por %p240, %p241
    %p244 = scmp.ne.s32.totalorder %s227, %s243
    %p245 = scmp.eq.s32.totalorder %s31, 0
    %p246 = por %p244, %p245
    %s247 = ssub.s32 %s25, %s32
    %p248 = scmp.eq.s32.totalorder %s247, 0
    %s250 = sadd.s32 %s249, 1
    %s251 = scalar_select %p248, %s249, %s250
    %p254 = pneg %p248
    %p255 = scmp.eq.s32.totalorder %s25, 1
    %p256 = por %p254, %p255
    %p257 = scmp.ne.s32.totalorder %s249, %s252
    %p258 = scmp.eq.s32.totalorder %s25, 0
    %p259 = por %p257, %p258
    %p260 = scmp.ne.s32.totalorder %s249, %s252
    %p261 = scmp.eq.s32.totalorder %s30, 1
    %p262 = por %p260, %p261
    %p263 = scmp.ne.s32.totalorder %s252, %s253
    %p264 = scmp.eq.s32.totalorder %s30, 0
    %p265 = por %p263, %p264
    %p266 = scmp.ne.s32.totalorder %s252, %s253
    %p267 = scmp.eq.s32.totalorder %s31, 1
    %p268 = por %p266, %p267
    %p270 = scmp.ne.s32.totalorder %s253, %s269
    %p271 = scmp.eq.s32.totalorder %s31, 0
    %p272 = por %p270, %p271
    %s273 = ssub.s32 %s25, %s32
    %p274 = scmp.eq.s32.totalorder %s273, 0
    %s276 = sadd.s32 %s275, 1
    %s277 = scalar_select %p274, %s275, %s276
    %p280 = pneg %p274
    %p281 = scmp.eq.s32.totalorder %s25, 1
    %p282 = por %p280, %p281
    %p283 = scmp.ne.s32.totalorder %s275, %s278
    %p284 = scmp.eq.s32.totalorder %s25, 0
    %p285 = por %p283, %p284
    %p286 = scmp.ne.s32.totalorder %s275, %s278
    %p287 = scmp.eq.s32.totalorder %s30, 1
    %p288 = por %p286, %p287
    %p289 = scmp.ne.s32.totalorder %s278, %s279
    %p290 = scmp.eq.s32.totalorder %s30, 0
    %p291 = por %p289, %p290
    %p292 = scmp.ne.s32.totalorder %s278, %s279
    %p293 = scmp.eq.s32.totalorder %s31, 1
    %p294 = por %p292, %p293
    %p296 = scmp.ne.s32.totalorder %s279, %s295
    %p297 = scmp.eq.s32.totalorder %s31, 0
    %p298 = por %p296, %p297
    %s299 = ssub.s32 %s25, %s32
    %p300 = scmp.eq.s32.totalorder %s299, 0
    %s302 = sadd.s32 %s301, 1
    %s303 = scalar_select %p300, %s301, %s302
    %p306 = pneg %p300
    %p307 = scmp.eq.s32.totalorder %s25, 1
    %p308 = por %p306, %p307
    %p309 = scmp.ne.s32.totalorder %s301, %s304
    %p310 = scmp.eq.s32.totalorder %s25, 0
    %p311 = por %p309, %p310
    %p312 = scmp.ne.s32.totalorder %s301, %s304
    %p313 = scmp.eq.s32.totalorder %s30, 1
    %p314 = por %p312, %p313
    %p315 = scmp.ne.s32.totalorder %s304, %s305
    %p316 = scmp.eq.s32.totalorder %s30, 0
    %p317 = por %p315, %p316
    %p318 = scmp.ne.s32.totalorder %s304, %s305
    %p319 = scmp.eq.s32.totalorder %s31, 1
    %p320 = por %p318, %p319
    %p322 = scmp.ne.s32.totalorder %s305, %s321
    %p323 = scmp.eq.s32.totalorder %s31, 0
    %p324 = por %p322, %p323
    %s325 = ssub.s32 %s25, %s32
    %p326 = scmp.eq.s32.totalorder %s325, 0
    %s328 = sadd.s32 %s327, 1
    %s329 = scalar_select %p326, %s327, %s328
    %p332 = pneg %p326
    %p333 = scmp.eq.s32.totalorder %s25, 1
    %p334 = por %p332, %p333
    %p335 = scmp.ne.s32.totalorder %s327, %s330
    %p336 = scmp.eq.s32.totalorder %s25, 0
    %p337 = por %p335, %p336
    %p338 = scmp.ne.s32.totalorder %s327, %s330
    %p339 = scmp.eq.s32.totalorder %s30, 1
    %p340 = por %p338, %p339
    %p341 = scmp.ne.s32.totalorder %s330, %s331
    %p342 = scmp.eq.s32.totalorder %s30, 0
    %p343 = por %p341, %p342
    %p344 = scmp.ne.s32.totalorder %s330, %s331
    %p345 = scmp.eq.s32.totalorder %s31, 1
    %p346 = por %p344, %p345
    %p348 = scmp.ne.s32.totalorder %s331, %s347
    %p349 = scmp.eq.s32.totalorder %s31, 0
    %p350 = por %p348, %p349
    %s351 = ssub.s32 %s25, %s32
    %p352 = scmp.eq.s32.totalorder %s351, 0
    %s354 = sadd.s32 %s353, 1
    %s355 = scalar_select %p352, %s353, %s354
    %p358 = pneg %p352
    %p359 = scmp.eq.s32.totalorder %s25, 1
    %p360 = por %p358, %p359
    %p361 = scmp.ne.s32.totalorder %s353, %s356
    %p362 = scmp.eq.s32.totalorder %s25, 0
    %p363 = por %p361, %p362
    %p364 = scmp.ne.s32.totalorder %s353, %s356
    %p365 = scmp.eq.s32.totalorder %s30, 1
    %p366 = por %p364, %p365
    %p367 = scmp.ne.s32.totalorder %s356, %s357
    %p368 = scmp.eq.s32.totalorder %s30, 0
    %p369 = por %p367, %p368
    %p370 = scmp.ne.s32.totalorder %s356, %s357
    %p371 = scmp.eq.s32.totalorder %s31, 1
    %p372 = por %p370, %p371
    %p374 = scmp.ne.s32.totalorder %s357, %s373
    %p375 = scmp.eq.s32.totalorder %s31, 0
    %p376 = por %p374, %p375
    %s377 = ssub.s32 %s25, %s32
    %p378 = scmp.eq.s32.totalorder %s377, 0
    %s380 = sadd.s32 %s379, 1
    %s381 = scalar_select %p378, %s379, %s380
    %p384 = pneg %p378
    %p385 = scmp.eq.s32.totalorder %s25, 1
    %p386 = por %p384, %p385
    %p387 = scmp.ne.s32.totalorder %s379, %s382
    %p388 = scmp.eq.s32.totalorder %s25, 0
    %p389 = por %p387, %p388
    %p390 = scmp.ne.s32.totalorder %s379, %s382
    %p391 = scmp.eq.s32.totalorder %s30, 1
    %p392 = por %p390, %p391
    %p393 = scmp.ne.s32.totalorder %s382, %s383
    %p394 = scmp.eq.s32.totalorder %s30, 0
    %p395 = por %p393, %p394
    %p396 = scmp.ne.s32.totalorder %s382, %s383
    %p397 = scmp.eq.s32.totalorder %s31, 1
    %p398 = por %p396, %p397
    %p400 = scmp.ne.s32.totalorder %s383, %s399
    %p401 = scmp.eq.s32.totalorder %s31, 0
    %p402 = por %p400, %p401
    %s403 = ssub.s32 %s25, %s32
    %p404 = scmp.eq.s32.totalorder %s403, 0
    %s406 = sadd.s32 %s405, 1
    %s407 = scalar_select %p404, %s405, %s406
    %p410 = pneg %p404
    %p411 = scmp.eq.s32.totalorder %s25, 1
    %p412 = por %p410, %p411
    %p413 = scmp.ne.s32.totalorder %s405, %s408
    %p414 = scmp.eq.s32.totalorder %s25, 0
    %p415 = por %p413, %p414
    %p416 = scmp.ne.s32.totalorder %s405, %s408
    %p417 = scmp.eq.s32.totalorder %s30, 1
    %p418 = por %p416, %p417
    %p419 = scmp.ne.s32.totalorder %s408, %s409
    %p420 = scmp.eq.s32.totalorder %s30, 0
    %p421 = por %p419, %p420
    %p422 = scmp.ne.s32.totalorder %s408, %s409
    %p423 = scmp.eq.s32.totalorder %s31, 1
    %p424 = por %p422, %p423
    %p426 = scmp.ne.s32.totalorder %s409, %s425
    %p427 = scmp.eq.s32.totalorder %s31, 0
    %p428 = por %p426, %p427
    %s430 = sadd.s32 %s429, 1
    %p433 = scmp.eq.s32.totalorder %s25, 1
    %p434 = scmp.ne.s32.totalorder %s429, %s431
    %p435 = scmp.eq.s32.totalorder %s25, 0
    %p436 = por %p434, %p435
    %p437 = scmp.ne.s32.totalorder %s429, %s431
    %p438 = scmp.eq.s32.totalorder %s30, 1
    %p439 = por %p437, %p438
    %p440 = scmp.ne.s32.totalorder %s431, %s432
    %p441 = scmp.eq.s32.totalorder %s30, 0
    %p442 = por %p440, %p441
    %p443 = scmp.ne.s32.totalorder %s431, %s432
    %p444 = scmp.eq.s32.totalorder %s31, 1
    %p445 = por %p443, %p444
    %p447 = scmp.ne.s32.totalorder %s432, %s446
    %p448 = scmp.eq.s32.totalorder %s31, 0
    %p449 = por %p447, %p448
    %s451 = sadd.s32 %s450, 1
    %p454 = scmp.eq.s32.totalorder %s25, 1
    %p455 = scmp.ne.s32.totalorder %s450, %s452
    %p456 = scmp.eq.s32.totalorder %s25, 0
    %p457 = por %p455, %p456
    %p458 = scmp.ne.s32.totalorder %s450, %s452
    %p459 = scmp.eq.s32.totalorder %s30, 1
    %p460 = por %p458, %p459
    %p461 = scmp.ne.s32.totalorder %s452, %s453
    %p462 = scmp.eq.s32.totalorder %s30, 0
    %p463 = por %p461, %p462
    %p464 = scmp.ne.s32.totalorder %s452, %s453
    %p465 = scmp.eq.s32.totalorder %s31, 1
    %p466 = por %p464, %p465
    %p468 = scmp.ne.s32.totalorder %s453, %s467
    %p469 = scmp.eq.s32.totalorder %s31, 0
    %p470 = por %p468, %p469
    %s472 = sadd.s32 %s471, 1
    %p475 = scmp.eq.s32.totalorder %s25, 1
    %p476 = scmp.ne.s32.totalorder %s471, %s473
    %p477 = scmp.eq.s32.totalorder %s25, 0
    %p478 = por %p476, %p477
    %p479 = scmp.ne.s32.totalorder %s471, %s473
    %p480 = scmp.eq.s32.totalorder %s30, 1
    %p481 = por %p479, %p480
    %p482 = scmp.ne.s32.totalorder %s473, %s474
    %p483 = scmp.eq.s32.totalorder %s30, 0
    %p484 = por %p482, %p483
    %p485 = scmp.ne.s32.totalorder %s473, %s474
    %p486 = scmp.eq.s32.totalorder %s31, 1
    %p487 = por %p485, %p486
    %p489 = scmp.ne.s32.totalorder %s474, %s488
    %p490 = scmp.eq.s32.totalorder %s31, 0
    %p491 = por %p489, %p490
    %s493 = sadd.s32 %s492, 1
    %p496 = scmp.eq.s32.totalorder %s25, 1
    %p497 = scmp.ne.s32.totalorder %s492, %s494
    %p498 = scmp.eq.s32.totalorder %s25, 0
    %p499 = por %p497, %p498
    %p500 = scmp.ne.s32.totalorder %s492, %s494
    %p501 = scmp.eq.s32.totalorder %s30, 1
    %p502 = por %p500, %p501
    %p503 = scmp.ne.s32.totalorder %s494, %s495
    %p504 = scmp.eq.s32.totalorder %s30, 0
    %p505 = por %p503, %p504
    %p506 = scmp.ne.s32.totalorder %s494, %s495
    %p507 = scmp.eq.s32.totalorder %s31, 1
    %p508 = por %p506, %p507
    %p510 = scmp.ne.s32.totalorder %s495, %s509
    %p511 = scmp.eq.s32.totalorder %s31, 0
    %p512 = por %p510, %p511
    %p513 = scmp.le.s32.totalorder 1, %s25
    %p514 = scmp.lt.s32.totalorder %s25, 3
    %p515 = pnand %p513, %p514
    %p516 = pneg %p515
    // Predicated region
    $region9: #{exposed_text_encoder.1} parent=5 // pred_check
      _
    $region10: #{exposed_text_encoder.1} parent=5 // pred_check_branch
      %518 = sbr.rel (%p515) target = $region12
    $region11: #{exposed_text_encoder.1} parent=5 // pred_region
      %s519 = ssub.s32 %s25, 1
      // Predicated region
      $region13: #{exposed_text_encoder.1} parent=11 // pred_check
        %p520 = pneg %p46
      $region14: #{exposed_text_encoder.1} parent=11 // pred_check_branch
        %522 = sbr.rel (%p520) target = $region16
      $region15: #{exposed_text_encoder.1} parent=11 // pred_region
        _
      $region16: #{exposed_text_encoder.1} parent=11 // pred_fallthru
        _
      // Predicated region
      $region17: #{exposed_text_encoder.1} parent=11 // pred_check
        %p523 = pneg %p67
      $region18: #{exposed_text_encoder.1} parent=11 // pred_check_branch
        %525 = sbr.rel (%p523) target = $region20
      $region19: #{exposed_text_encoder.1} parent=11 // pred_region
        _
      $region20: #{exposed_text_encoder.1} parent=11 // pred_fallthru
        _
      // Predicated region
      $region21: #{exposed_text_encoder.1} parent=11 // pred_check
        %p526 = pneg %p88
      $region22: #{exposed_text_encoder.1} parent=11 // pred_check_branch
        %528 = sbr.rel (%p526) target = $region24
      $region23: #{exposed_text_encoder.1} parent=11 // pred_region
        _
      $region24: #{exposed_text_encoder.1} parent=11 // pred_fallthru
        _
      // Predicated region
      $region25: #{exposed_text_encoder.1} parent=11 // pred_check
        %p529 = pneg %p109
      $region26: #{exposed_text_encoder.1} parent=11 // pred_check_branch
        %531 = sbr.rel (%p529) target = $region28
      $region27: #{exposed_text_encoder.1} parent=11 // pred_region
        _
      $region28: #{exposed_text_encoder.1} parent=11 // pred_fallthru
        _
      // Predicated region
      $region29: #{exposed_text_encoder.1} parent=11 // pred_check
        %p532 = pneg %p442
      $region30: #{exposed_text_encoder.1} parent=11 // pred_check_branch
        %534 = sbr.rel (%p532) target = $region32
      $region31: #{exposed_text_encoder.1} parent=11 // pred_region
        _
      $region32: #{exposed_text_encoder.1} parent=11 // pred_fallthru
        _
      // Predicated region
      $region33: #{exposed_text_encoder.1} parent=11 // pred_check
        %p535 = pneg %p463
      $region34: #{exposed_text_encoder.1} parent=11 // pred_check_branch
        %537 = sbr.rel (%p535) target = $region36
      $region35: #{exposed_text_encoder.1} parent=11 // pred_region
        _
      $region36: #{exposed_text_encoder.1} parent=11 // pred_fallthru
        _
      // Predicated region
      $region37: #{exposed_text_encoder.1} parent=11 // pred_check
        %p538 = pneg %p484
      $region38: #{exposed_text_encoder.1} parent=11 // pred_check_branch
        %540 = sbr.rel (%p538) target = $region40
      $region39: #{exposed_text_encoder.1} parent=11 // pred_region
        _
      $region40: #{exposed_text_encoder.1} parent=11 // pred_fallthru
        _
    $region12: #{exposed_text_encoder.1} parent=5 // pred_fallthru
      _
    %p541 = scmp.lt.s32.totalorder %s25, 2
    // Predicated region
    $region41: #{exposed_text_encoder.1} parent=5 // pred_check
      %p542 = pneg %p541
    $region42: #{exposed_text_encoder.1} parent=5 // pred_check_branch
      %544 = sbr.rel (%p542) target = $region44
    $region43: #{exposed_text_encoder.1} parent=5 // pred_region
      // Predicated region
      $region45: #{exposed_text_encoder.1} parent=43 // pred_check
        %p545 = pneg %p129
      $region46: #{exposed_text_encoder.1} parent=43 // pred_check_branch
        %547 = sbr.rel (%p545) target = $region48
      $region47: #{exposed_text_encoder.1} parent=43 // pred_region
        %p548 = scmp.lt.s32.totalorder %s25, 1
        %s549 = scalar_select %p548, %s25, 1
        %s550 = scalar_lea.vmem %s4, %s549
      $region48: #{exposed_text_encoder.1} parent=43 // pred_fallthru
        _
      // Predicated region
      $region49: #{exposed_text_encoder.1} parent=43 // pred_check
        %p551 = pneg %p155
      $region50: #{exposed_text_encoder.1} parent=43 // pred_check_branch
        %553 = sbr.rel (%p551) target = $region52
      $region51: #{exposed_text_encoder.1} parent=43 // pred_region
        %p554 = scmp.lt.s32.totalorder %s25, 1
        %s555 = scalar_select %p554, %s25, 1
        %s556 = scalar_lea.vmem %s5, %s555
      $region52: #{exposed_text_encoder.1} parent=43 // pred_fallthru
        _
      // Predicated region
      $region53: #{exposed_text_encoder.1} parent=43 // pred_check
        %p557 = pneg %p181
      $region54: #{exposed_text_encoder.1} parent=43 // pred_check_branch
        %559 = sbr.rel (%p557) target = $region56
      $region55: #{exposed_text_encoder.1} parent=43 // pred_region
        %p560 = scmp.lt.s32.totalorder %s25, 1
        %s561 = scalar_select %p560, %s25, 1
        %s562 = smul.addr %s561, 4
        %s563 = smul.addr %s562, 4
        %s564 = scalar_lea.vmem %s6, %s563
      $region56: #{exposed_text_encoder.1} parent=43 // pred_fallthru
        _
      // Predicated region
      $region57: #{exposed_text_encoder.1} parent=43 // pred_check
        %p565 = pneg %p207
      $region58: #{exposed_text_encoder.1} parent=43 // pred_check_branch
        %567 = sbr.rel (%p565) target = $region60
      $region59: #{exposed_text_encoder.1} parent=43 // pred_region
        %p568 = scmp.lt.s32.totalorder %s25, 1
        %s569 = scalar_select %p568, %s25, 1
        %s570 = scalar_lea.vmem %s7, %s569
      $region60: #{exposed_text_encoder.1} parent=43 // pred_fallthru
        _
      // Predicated region
      $region61: #{exposed_text_encoder.1} parent=43 // pred_check
        %p571 = pneg %p233
      $region62: #{exposed_text_encoder.1} parent=43 // pred_check_branch
        %573 = sbr.rel (%p571) target = $region64
      $region63: #{exposed_text_encoder.1} parent=43 // pred_region
        %p574 = scmp.lt.s32.totalorder %s25, 1
        %s575 = scalar_select %p574, %s25, 1
        %s576 = smul.addr %s575, 4
        %s577 = smul.addr %s576, 4
        %s578 = scalar_lea.vmem %s8, %s577
      $region64: #{exposed_text_encoder.1} parent=43 // pred_fallthru
        _
      // Predicated region
      $region65: #{exposed_text_encoder.1} parent=43 // pred_check
        %p579 = pneg %p259
      $region66: #{exposed_text_encoder.1} parent=43 // pred_check_branch
        %581 = sbr.rel (%p579) target = $region68
      $region67: #{exposed_text_encoder.1} parent=43 // pred_region
        %p582 = scmp.lt.s32.totalorder %s25, 1
        %s583 = scalar_select %p582, %s25, 1
        %s584 = scalar_lea.vmem %s9, %s583
      $region68: #{exposed_text_encoder.1} parent=43 // pred_fallthru
        _
      // Predicated region
      $region69: #{exposed_text_encoder.1} parent=43 // pred_check
        %p585 = pneg %p285
      $region70: #{exposed_text_encoder.1} parent=43 // pred_check_branch
        %587 = sbr.rel (%p585) target = $region72
      $region71: #{exposed_text_encoder.1} parent=43 // pred_region
        %p588 = scmp.lt.s32.totalorder %s25, 1
        %s589 = scalar_select %p588, %s25, 1
        %s590 = scalar_lea.vmem %s10, %s589
      $region72: #{exposed_text_encoder.1} parent=43 // pred_fallthru
        _
      // Predicated region
      $region73: #{exposed_text_encoder.1} parent=43 // pred_check
        %p591 = pneg %p311
      $region74: #{exposed_text_encoder.1} parent=43 // pred_check_branch
        %593 = sbr.rel (%p591) target = $region76
      $region75: #{exposed_text_encoder.1} parent=43 // pred_region
        %p594 = scmp.lt.s32.totalorder %s25, 1
        %s595 = scalar_select %p594, %s25, 1
        %s596 = scalar_lea.vmem %s11, %s595
      $region76: #{exposed_text_encoder.1} parent=43 // pred_fallthru
        _
      // Predicated region
      $region77: #{exposed_text_encoder.1} parent=43 // pred_check
        %p597 = pneg %p337
      $region78: #{exposed_text_encoder.1} parent=43 // pred_check_branch
        %599 = sbr.rel (%p597) target = $region80
      $region79: #{exposed_text_encoder.1} parent=43 // pred_region
        %p600 = scmp.lt.s32.totalorder %s25, 1
        %s601 = scalar_select %p600, %s25, 1
        %s602 = smul.addr %s601, 4
        %s603 = smul.addr %s602, 4
        %s604 = scalar_lea.vmem %s12, %s603
      $region80: #{exposed_text_encoder.1} parent=43 // pred_fallthru
        _
      // Predicated region
      $region81: #{exposed_text_encoder.1} parent=43 // pred_check
        %p605 = pneg %p363
      $region82: #{exposed_text_encoder.1} parent=43 // pred_check_branch
        %607 = sbr.rel (%p605) target = $region84
      $region83: #{exposed_text_encoder.1} parent=43 // pred_region
        %p608 = scmp.lt.s32.totalorder %s25, 1
        %s609 = scalar_select %p608, %s25, 1
        %s610 = scalar_lea.vmem %s13, %s609
      $region84: #{exposed_text_encoder.1} parent=43 // pred_fallthru
        _
      // Predicated region
      $region85: #{exposed_text_encoder.1} parent=43 // pred_check
        %p611 = pneg %p389
      $region86: #{exposed_text_encoder.1} parent=43 // pred_check_branch
        %613 = sbr.rel (%p611) target = $region88
      $region87: #{exposed_text_encoder.1} parent=43 // pred_region
        %p614 = scmp.lt.s32.totalorder %s25, 1
        %s615 = scalar_select %p614, %s25, 1
        %s616 = smul.addr %s615, 16
        %s617 = smul.addr %s616, 4
        %s618 = scalar_lea.vmem %s14, %s617
      $region88: #{exposed_text_encoder.1} parent=43 // pred_fallthru
        _
      // Predicated region
      $region89: #{exposed_text_encoder.1} parent=43 // pred_check
        %p619 = pneg %p415
      $region90: #{exposed_text_encoder.1} parent=43 // pred_check_branch
        %621 = sbr.rel (%p619) target = $region92
      $region91: #{exposed_text_encoder.1} parent=43 // pred_region
        %p622 = scmp.lt.s32.totalorder %s25, 1
        %s623 = scalar_select %p622, %s25, 1
        %s624 = scalar_lea.vmem %s15, %s623
      $region92: #{exposed_text_encoder.1} parent=43 // pred_fallthru
        _
    $region44: #{exposed_text_encoder.1} parent=5 // pred_fallthru
      _
    %p625 = scmp.le.s32.totalorder 1, %s25
    %p626 = scmp.lt.s32.totalorder %s25, 3
    %p627 = pnand %p625, %p626
    %p628 = pneg %p627
    // Predicated region
    $region93: #{exposed_text_encoder.1} parent=5 // pred_check
      _
    $region94: #{exposed_text_encoder.1} parent=5 // pred_check_branch
      %630 = sbr.rel (%p627) target = $region96
    $region95: #{exposed_text_encoder.1} parent=5 // pred_region
      %s631 = ssub.s32 %s25, 1
      %p632 = pneg %p46
      %p633 = pneg %p43
      %p634 = pneg %p67
      %p635 = pneg %p64
      %p636 = pneg %p88
      %p637 = pneg %p85
      %p638 = pneg %p109
      %p639 = pneg %p106
      %p640 = scmp.lt.s32.totalorder %s30, 1
      %s641 = scalar_select %p640, %s30, 1
      %s642 = scalar_lea.vmem %s4, %s641
      %p643 = pneg %p135
      %p644 = pneg %p132
      %p645 = scmp.lt.s32.totalorder %s30, 1
      %s646 = scalar_select %p645, %s30, 1
      %s647 = scalar_lea.vmem %s5, %s646
      %p648 = pneg %p161
      %p649 = pneg %p158
      %p650 = scmp.lt.s32.totalorder %s30, 1
      %s651 = scalar_select %p650, %s30, 1
      %s652 = smul.addr %s651, 4
      %s653 = smul.addr %s652, 4
      %s654 = scalar_lea.vmem %s6, %s653
      %p655 = pneg %p187
      %p656 = pneg %p184
      %p657 = scmp.lt.s32.totalorder %s30, 1
      %s658 = scalar_select %p657, %s30, 1
      %s659 = scalar_lea.vmem %s7, %s658
      %p660 = pneg %p213
      %p661 = pneg %p210
      %p662 = scmp.lt.s32.totalorder %s30, 1
      %s663 = scalar_select %p662, %s30, 1
      %s664 = smul.addr %s663, 4
      %s665 = smul.addr %s664, 4
      %s666 = scalar_lea.vmem %s8, %s665
      %p667 = pneg %p239
      %p668 = pneg %p236
      %p669 = scmp.lt.s32.totalorder %s30, 1
      %s670 = scalar_select %p669, %s30, 1
      %s671 = scalar_lea.vmem %s9, %s670
      %p672 = pneg %p265
      %p673 = pneg %p262
      %p674 = scmp.lt.s32.totalorder %s30, 1
      %s675 = scalar_select %p674, %s30, 1
      %s676 = scalar_lea.vmem %s10, %s675
      %p677 = pneg %p291
      %p678 = pneg %p288
      %p679 = scmp.lt.s32.totalorder %s30, 1
      %s680 = scalar_select %p679, %s30, 1
      %s681 = scalar_lea.vmem %s11, %s680
      %p682 = pneg %p317
      %p683 = pneg %p314
      %p684 = scmp.lt.s32.totalorder %s30, 1
      %s685 = scalar_select %p684, %s30, 1
      %s686 = smul.addr %s685, 4
      %s687 = smul.addr %s686, 4
      %s688 = scalar_lea.vmem %s12, %s687
      %p689 = pneg %p343
      %p690 = pneg %p340
      %p691 = scmp.lt.s32.totalorder %s30, 1
      %s692 = scalar_select %p691, %s30, 1
      %s693 = scalar_lea.vmem %s13, %s692
      %p694 = pneg %p369
      %p695 = pneg %p366
      %p696 = scmp.lt.s32.totalorder %s30, 1
      %s697 = scalar_select %p696, %s30, 1
      %s698 = smul.addr %s697, 16
      %s699 = smul.addr %s698, 4
      %s700 = scalar_lea.vmem %s14, %s699
      %p701 = pneg %p395
      %p702 = pneg %p392
      %p703 = scmp.lt.s32.totalorder %s30, 1
      %s704 = scalar_select %p703, %s30, 1
      %s705 = scalar_lea.vmem %s15, %s704
      %p706 = pneg %p421
      %p707 = pneg %p418
      %p708 = pneg %p442
      %p709 = pneg %p439
      %p710 = pneg %p463
      %p711 = pneg %p460
      %p712 = pneg %p484
      %p713 = pneg %p481
      %p714 = pneg %p505
      %p715 = pneg %p502
      %p716 = scmp.lt.s32.totalorder %s30, 1
      %s717 = scalar_select %p716, %s30, 1
      %s718 = scalar_lea.vmem %s4, %s717
      %p719 = scmp.lt.s32.totalorder %s30, 1
      %s720 = scalar_select %p719, %s30, 1
      %s721 = scalar_lea.vmem %s5, %s720
      %p722 = scmp.lt.s32.totalorder %s30, 1
      %s723 = scalar_select %p722, %s30, 1
      %s724 = smul.addr %s723, 4
      %s725 = smul.addr %s724, 4
      %s726 = scalar_lea.vmem %s6, %s725
      %p727 = scmp.lt.s32.totalorder %s30, 1
      %s728 = scalar_select %p727, %s30, 1
      %s729 = scalar_lea.vmem %s7, %s728
      %p730 = scmp.lt.s32.totalorder %s30, 1
      %s731 = scalar_select %p730, %s30, 1
      %s732 = smul.addr %s731, 4
      %s733 = smul.addr %s732, 4
      %s734 = scalar_lea.vmem %s8, %s733
      %p735 = scmp.lt.s32.totalorder %s30, 1
      %s736 = scalar_select %p735, %s30, 1
      %s737 = scalar_lea.vmem %s9, %s736
      %p738 = scmp.lt.s32.totalorder %s30, 1
      %s739 = scalar_select %p738, %s30, 1
      %s740 = scalar_lea.vmem %s10, %s739
      %p741 = scmp.lt.s32.totalorder %s30, 1
      %s742 = scalar_select %p741, %s30, 1
      %s743 = scalar_lea.vmem %s11, %s742
      %p744 = scmp.lt.s32.totalorder %s30, 1
      %s745 = scalar_select %p744, %s30, 1
      %s746 = smul.addr %s745, 4
      %s747 = smul.addr %s746, 4
      %s748 = scalar_lea.vmem %s12, %s747
      %p749 = scmp.lt.s32.totalorder %s30, 1
      %s750 = scalar_select %p749, %s30, 1
      %s751 = scalar_lea.vmem %s13, %s750
      %p752 = scmp.lt.s32.totalorder %s30, 1
      %s753 = scalar_select %p752, %s30, 1
      %s754 = smul.addr %s753, 16
      %s755 = smul.addr %s754, 4
      %s756 = scalar_lea.vmem %s14, %s755
      %p757 = scmp.lt.s32.totalorder %s30, 1
      %s758 = scalar_select %p757, %s30, 1
      %s759 = scalar_lea.vmem %s15, %s758
      %p761 = scmp.eq.s32.totalorder %s30, 0
      // Predicated region
      $region97: #{exposed_text_encoder.1} parent=95 // pred_check
        %p762 = pneg %p761
      $region98: #{exposed_text_encoder.1} parent=95 // pred_check_branch
        %764 = sbr.rel (%p762) target = $region100
      $region99: #{exposed_text_encoder.1} parent=95 // pred_region
        %v765 = vld [vmem:[%s0] sm:$0xff]
        %v766 = vld [vmem:[%s0 + $0x8] sm:$0xff]
        %vm767 = vcmask 261120
        %768 = vst.msk [vmem:[#allocation2] sm:$0xff] %vm767, %v765
        %769 = vst.msk [vmem:[#allocation2 + $0x8] sm:$0xff] %vm767, %v766
        %vm770 = vcmask 58368
        %771 = vst.msk [vmem:[#allocation3] sm:$0x3] %vm770, 0.0
      $region100: #{exposed_text_encoder.1} parent=95 // pred_fallthru
        _
      %v772 = vld [vmem:[#allocation2] sm:$0xff]
      %v773 = vld [vmem:[#allocation2 + $0x8] sm:$0xff]
      %v774 = vld [vmem:[%s1] sm:$0x3]
      %v775 = vld [vmem:[%s2] sm:$0xff]
      %v776 = vld [vmem:[%s2 + $0x8] sm:$0xff]
      %v777 = vld [vmem:[%s718] sm:$0x1]
      %v778 = vld [vmem:[%s721] sm:$0x1]
      %vm779 = vcmask 261120
      %v780 = vsel %vm779, %v772, 0.0
      %781 = vadd.xlane.f32.xlu0 %v780
      %v782 = vpop.xlane.xlu0 %781
      %v783 = vsel %vm779, %v773, 0.0
      %784 = vadd.xlane.f32.xlu0 %v783
      %v785 = vpop.xlane.xlu0 %784
      %v786 = vrcp.pop 32.0
      %v787 = vmul.f32 %v782, %v786
      %v788 = vmul.f32 %v785, %v786
      %v789 = vsub.f32 %v772, %v787
      %v790 = vsub.f32 %v773, %v788
      %v791 = vmul.f32 %v789, %v789
      %v792 = vmul.f32 %v790, %v790
      %v793 = vsel %vm779, %v791, 0.0
      %794 = vadd.xlane.f32.xlu0 %v793
      %v795 = vpop.xlane.xlu0 %794
      %v796 = vsel %vm779, %v792, 0.0
      %797 = vadd.xlane.f32.xlu0 %v796
      %v798 = vpop.xlane.xlu0 %797
      %v799 = vmul.f32 %v795, %v786
      %v800 = vmul.f32 %v798, %v786
      %v801 = vadd.f32 %v799, 1e-05
      %v802 = vadd.f32 %v800, 1e-05
      %v803 = vrsqrt.pop %v801
      %v804 = vrsqrt.pop %v802
      %v805 = vmul.f32 %v789, %v803
      %v806 = vmul.f32 %v790, %v804
      %v808 = vlaneseq
      %v809 = vshrl.u32 %v808, 7
      %v810 = vsub.s32 0, %v809
      %v811 = vrot.slane %v777, %v810
      %v813 = vmul.f32 %v805, %v811
      %v814 = vmul.f32 %v806, %v811
      %v816 = vlaneseq
      %v817 = vshrl.u32 %v816, 7
      %v818 = vsub.s32 0, %v817
      %v819 = vrot.slane %v778, %v818
      %v821 = vadd.f32 %v813, %v819
      %v822 = vadd.f32 %v814, %v819
      %v823 = vpack.c.bf16 %v822, %v821
      %v824 = vld [vmem:[%s726] sm:$0xf]
      %v825 = vld [vmem:[%s726 + $0x4] sm:$0xf]
      %v826 = vld [vmem:[%s726 + $0x8] sm:$0xf]
      %v827 = vld [vmem:[%s726 + $0xc] sm:$0xf]
      %v828 = vld [vmem:[%s729] sm:$0x1]
      %v830 = vlaneseq
      %v831 = vshrl.u32 %v830, 7
      %v832 = vsub.s32 0, %v831
      %v833 = vrot.slane %v828, %v832
      %v839 = vunpack.c.l.b16 %v824
      %v840 = vunpack.c.l.b16 %v825
      %v841 = vunpack.c.l.b16 %v826
      %v842 = vunpack.c.l.b16 %v827
      %v843 = vpack.c.b16 %v840, %v839
      %v844 = vpack.c.b16 %v842, %v841
      %v848 = vsel %vm779, %v823, 0
      %850 = vmatprep.subr.bf16.mxu0 0
      %851 = vmatpush1.bf16.msra.mxu0 %v843
      %852 = vmatprep.subr.bf16.mxu0 0
      %853 = vmatpush1.bf16.msra.mxu0 %v844
      %854 = vmatprep.subr.bf16.mxu0 0
      %855 = vmatpush1.bf16.msra.mxu0 0
      %856 = vmatprep.subr.bf16.mxu0 0
      %857 = vmatpush1.bf16.msra.mxu0 0
      %858 = vmatprep.subr.bf16.mxu0 0
      %859 = vmatpush1.bf16.msra.mxu0 0
      %860 = vmatprep.subr.bf16.mxu0 0
      %861 = vmatpush1.bf16.msra.mxu0 0
      %862 = vmatprep.subr.bf16.mxu0 0
      %863 = vmatpush1.bf16.msra.mxu0 0
      %864 = vmatprep.subr.bf16.mxu0 0
      %865 = vmatpush1.bf16.msra.mxu0 0
      %866 = vmatprep.subr.bf16.mxu0 0
      %867 = vmatpush1.bf16.msra.mxu0 0
      %868 = vmatprep.subr.bf16.mxu0 0
      %869 = vmatpush1.bf16.msra.mxu0 0
      %870 = vmatprep.subr.bf16.mxu0 0
      %871 = vmatpush1.bf16.msra.mxu0 0
      %872 = vmatprep.subr.bf16.mxu0 0
      %873 = vmatpush1.bf16.msra.mxu0 0
      %874 = vmatprep.subr.bf16.mxu0 0
      %875 = vmatpush1.bf16.msra.mxu0 0
      %876 = vmatprep.subr.bf16.mxu0 0
      %877 = vmatpush1.bf16.msra.mxu0 0
      %878 = vmatprep.subr.bf16.mxu0 0
      %879 = vmatpush1.bf16.msra.mxu0 0
      %880 = vmatprep.subr.bf16.mxu0 0
      %881 = vmatpush1.bf16.msra.mxu0 0
      %882 = vmatprep.mubr.bf16.mxu0 0
      %883 = vmatmul.mubr.bf16.gmra.mrb[0].mxu0 %v848
      %v884 = vpop.f32.mrb[0].mxu0
      %v885 = vadd.f32 %v833, %v884
      %v886 = vpop.f32.mrb[0].mxu0
      %v887 = vpop.f32.mrb[0].mxu0
      %v888 = vadd.f32 %v833, %v887
      %v889 = vpop.f32.mrb[0].mxu0
      %890 = vdwg.mxu0
      %893 = vrot.lane.b32.xlu0 %v885, 120
      %v894 = vpop.permute.xlu0 %893
      %895 = vrot.lane.b32.xlu0 %v888, 120
      %v896 = vpop.permute.xlu0 %895
      %899 = vrot.lane.b32.xlu0 %v885, 112
      %v900 = vpop.permute.xlu0 %899
      %901 = vrot.lane.b32.xlu0 %v888, 112
      %v902 = vpop.permute.xlu0 %901
      %905 = vrot.lane.b32.xlu0 %v885, 104
      %v906 = vpop.permute.xlu0 %905
      %907 = vrot.lane.b32.xlu0 %v888, 104
      %v908 = vpop.permute.xlu0 %907
      %v911 = vpack.c.bf16 %v888, %v885
      %v912 = vpack.c.bf16 %v896, %v894
      %v913 = vpack.c.bf16 %v902, %v900
      %v914 = vpack.c.bf16 %v908, %v906
      %916 = vrot.lane.b32.xlu0 %v911, 96
      %v917 = vpop.permute.xlu0 %916
      %vm918 = vcmask 64512
      %v920 = vsel %vm918, %v911, 0
      %v923 = vsel %vm918, %v917, 0
      %925 = vmatprep.subr.bf16.mxu0 0
      %926 = vmatpush1.bf16.xpose.msra.mxu0 %v923
      %927 = vmatprep.subr.bf16.mxu0 0
      %928 = vmatpush1.bf16.xpose.msra.mxu0 0
      %929 = vmatprep.subr.bf16.mxu0 0
      %930 = vmatpush1.bf16.xpose.msra.mxu0 0
      %931 = vmatprep.subr.bf16.mxu0 0
      %932 = vmatpush1.bf16.xpose.msra.mxu0 0
      %933 = vmatprep.subr.bf16.mxu0 0
      %934 = vmatpush1.bf16.xpose.msra.mxu0 0
      %935 = vmatprep.subr.bf16.mxu0 0
      %936 = vmatpush1.bf16.xpose.msra.mxu0 0
      %937 = vmatprep.subr.bf16.mxu0 0
      %938 = vmatpush1.bf16.xpose.msra.mxu0 0
      %939 = vmatprep.subr.bf16.mxu0 0
      %940 = vmatpush1.bf16.xpose.msra.mxu0 0
      %941 = vmatprep.subr.bf16.mxu0 0
      %942 = vmatpush1.bf16.xpose.msra.mxu0 0
      %943 = vmatprep.subr.bf16.mxu0 0
      %944 = vmatpush1.bf16.xpose.msra.mxu0 0
      %945 = vmatprep.subr.bf16.mxu0 0
      %946 = vmatpush1.bf16.xpose.msra.mxu0 0
      %947 = vmatprep.subr.bf16.mxu0 0
      %948 = vmatpush1.bf16.xpose.msra.mxu0 0
      %949 = vmatprep.subr.bf16.mxu0 0
      %950 = vmatpush1.bf16.xpose.msra.mxu0 0
      %951 = vmatprep.subr.bf16.mxu0 0
      %952 = vmatpush1.bf16.xpose.msra.mxu0 0
      %953 = vmatprep.subr.bf16.mxu0 0
      %954 = vmatpush1.bf16.xpose.msra.mxu0 0
      %955 = vmatprep.subr.bf16.mxu0 0
      %956 = vmatpush1.bf16.xpose.msra.mxu0 0
      %957 = vmatprep.mubr.bf16.mxu0 0
      %958 = vmatmul.mubr.bf16.gmra.mrb[0].mxu0 %v920
      %v959 = vpop.f32.mrb[0].mxu0
      %v960 = vadd.f32 %v775, %v959
      %v961 = vpop.f32.mrb[0].mxu0
      %v962 = vpop.f32.mrb[0].mxu0
      %v963 = vadd.f32 %v776, %v962
      %v964 = vpop.f32.mrb[0].mxu0
      %965 = vdwg.mxu0
      %967 = vrot.lane.b32.xlu0 %v912, 96
      %v968 = vpop.permute.xlu0 %967
      %v970 = vsel %vm918, %v912, 0
      %v973 = vsel %vm918, %v968, 0
      %975 = vmatprep.subr.bf16.mxu0 0
      %976 = vmatpush1.bf16.xpose.msra.mxu0 %v973
      %977 = vmatprep.subr.bf16.mxu0 0
      %978 = vmatpush1.bf16.xpose.msra.mxu0 0
      %979 = vmatprep.subr.bf16.mxu0 0
      %980 = vmatpush1.bf16.xpose.msra.mxu0 0
      %981 = vmatprep.subr.bf16.mxu0 0
      %982 = vmatpush1.bf16.xpose.msra.mxu0 0
      %983 = vmatprep.subr.bf16.mxu0 0
      %984 = vmatpush1.bf16.xpose.msra.mxu0 0
      %985 = vmatprep.subr.bf16.mxu0 0
      %986 = vmatpush1.bf16.xpose.msra.mxu0 0
      %987 = vmatprep.subr.bf16.mxu0 0
      %988 = vmatpush1.bf16.xpose.msra.mxu0 0
      %989 = vmatprep.subr.bf16.mxu0 0
      %990 = vmatpush1.bf16.xpose.msra.mxu0 0
      %991 = vmatprep.subr.bf16.mxu0 0
      %992 = vmatpush1.bf16.xpose.msra.mxu0 0
      %993 = vmatprep.subr.bf16.mxu0 0
      %994 = vmatpush1.bf16.xpose.msra.mxu0 0
      %995 = vmatprep.subr.bf16.mxu0 0
      %996 = vmatpush1.bf16.xpose.msra.mxu0 0
      %997 = vmatprep.subr.bf16.mxu0 0
      %998 = vmatpush1.bf16.xpose.msra.mxu0 0
      %999 = vmatprep.subr.bf16.mxu0 0
      %1000 = vmatpush1.bf16.xpose.msra.mxu0 0
      %1001 = vmatprep.subr.bf16.mxu0 0
      %1002 = vmatpush1.bf16.xpose.msra.mxu0 0
      %1003 = vmatprep.subr.bf16.mxu0 0
      %1004 = vmatpush1.bf16.xpose.msra.mxu0 0
      %1005 = vmatprep.subr.bf16.mxu0 0
      %1006 = vmatpush1.bf16.xpose.msra.mxu0 0
      %1007 = vmatprep.mubr.bf16.mxu0 0
      %1008 = vmatmul.mubr.bf16.gmra.mrb[0].mxu0 %v970
      %v1009 = vpop.f32.mrb[0].mxu0
      %v1010 = vadd.f32 %v775, %v1009
      %v1011 = vpop.f32.mrb[0].mxu0
      %v1012 = vpop.f32.mrb[0].mxu0
      %v1013 = vadd.f32 %v776, %v1012
      %v1014 = vpop.f32.mrb[0].mxu0
      %1015 = vdwg.mxu0
      %1017 = vrot.lane.b32.xlu0 %v913, 96
      %v1018 = vpop.permute.xlu0 %1017
      %v1020 = vsel %vm918, %v913, 0
      %v1023 = vsel %vm918, %v1018, 0
      %1025 = vmatprep.subr.bf16.mxu0 0
      %1026 = vmatpush1.bf16.xpose.msra.mxu0 %v1023
      %1027 = vmatprep.subr.bf16.mxu0 0
      %1028 = vmatpush1.bf16.xpose.msra.mxu0 0
      %1029 = vmatprep.subr.bf16.mxu0 0
      %1030 = vmatpush1.bf16.xpose.msra.mxu0 0
      %1031 = vmatprep.subr.bf16.mxu0 0
      %1032 = vmatpush1.bf16.xpose.msra.mxu0 0
      %1033 = vmatprep.subr.bf16.mxu0 0
      %1034 = vmatpush1.bf16.xpose.msra.mxu0 0
      %1035 = vmatprep.subr.bf16.mxu0 0
      %1036 = vmatpush1.bf16.xpose.msra.mxu0 0
      %1037 = vmatprep.subr.bf16.mxu0 0
      %1038 = vmatpush1.bf16.xpose.msra.mxu0 0
      %1039 = vmatprep.subr.bf16.mxu0 0
      %1040 = vmatpush1.bf16.xpose.msra.mxu0 0
      %1041 = vmatprep.subr.bf16.mxu0 0
      %1042 = vmatpush1.bf16.xpose.msra.mxu0 0
      %1043 = vmatprep.subr.bf16.mxu0 0
      %1044 = vmatpush1.bf16.xpose.msra.mxu0 0
      %1045 = vmatprep.subr.bf16.mxu0 0
      %1046 = vmatpush1.bf16.xpose.msra.mxu0 0
      %1047 = vmatprep.subr.bf16.mxu0 0
      %1048 = vmatpush1.bf16.xpose.msra.mxu0 0
      %1049 = vmatprep.subr.bf16.mxu0 0
      %1050 = vmatpush1.bf16.xpose.msra.mxu0 0
      %1051 = vmatprep.subr.bf16.mxu0 0
      %1052 = vmatpush1.bf16.xpose.msra.mxu0 0
      %1053 = vmatprep.subr.bf16.mxu0 0
      %1054 = vmatpush1.bf16.xpose.msra.mxu0 0
      %1055 = vmatprep.subr.bf16.mxu0 0
      %1056 = vmatpush1.bf16.xpose.msra.mxu0 0
      %1057 = vmatprep.mubr.bf16.mxu0 0
      %1058 = vmatmul.mubr.bf16.gmra.mrb[0].mxu0 %v1020
      %v1059 = vpop.f32.mrb[0].mxu0
      %v1060 = vadd.f32 %v775, %v1059
      %v1061 = vpop.f32.mrb[0].mxu0
      %v1062 = vpop.f32.mrb[0].mxu0
      %v1063 = vadd.f32 %v776, %v1062
      %v1064 = vpop.f32.mrb[0].mxu0
      %1065 = vdwg.mxu0
      %1067 = vrot.lane.b32.xlu0 %v914, 96
      %v1068 = vpop.permute.xlu0 %1067
      %v1070 = vsel %vm918, %v914, 0
      %v1073 = vsel %vm918, %v1068, 0
      %1075 = vmatprep.subr.bf16.mxu0 0
      %1076 = vmatpush1.bf16.xpose.msra.mxu0 %v1073
      %1077 = vmatprep.subr.bf16.mxu0 0
      %1078 = vmatpush1.bf16.xpose.msra.mxu0 0
      %1079 = vmatprep.subr.bf16.mxu0 0
      %1080 = vmatpush1.bf16.xpose.msra.mxu0 0
      %1081 = vmatprep.subr.bf16.mxu0 0
      %1082 = vmatpush1.bf16.xpose.msra.mxu0 0
      %1083 = vmatprep.subr.bf16.mxu0 0
      %1084 = vmatpush1.bf16.xpose.msra.mxu0 0
      %1085 = vmatprep.subr.bf16.mxu0 0
      %1086 = vmatpush1.bf16.xpose.msra.mxu0 0
      %1087 = vmatprep.subr.bf16.mxu0 0
      %1088 = vmatpush1.bf16.xpose.msra.mxu0 0
      %1089 = vmatprep.subr.bf16.mxu0 0
      %1090 = vmatpush1.bf16.xpose.msra.mxu0 0
      %1091 = vmatprep.subr.bf16.mxu0 0
      %1092 = vmatpush1.bf16.xpose.msra.mxu0 0
      %1093 = vmatprep.subr.bf16.mxu0 0
      %1094 = vmatpush1.bf16.xpose.msra.mxu0 0
      %1095 = vmatprep.subr.bf16.mxu0 0
      %1096 = vmatpush1.bf16.xpose.msra.mxu0 0
      %1097 = vmatprep.subr.bf16.mxu0 0
      %1098 = vmatpush1.bf16.xpose.msra.mxu0 0
      %1099 = vmatprep.subr.bf16.mxu0 0
      %1100 = vmatpush1.bf16.xpose.msra.mxu0 0
      %1101 = vmatprep.subr.bf16.mxu0 0
      %1102 = vmatpush1.bf16.xpose.msra.mxu0 0
      %1103 = vmatprep.subr.bf16.mxu0 0
      %1104 = vmatpush1.bf16.xpose.msra.mxu0 0
      %1105 = vmatprep.subr.bf16.mxu0 0
      %1106 = vmatpush1.bf16.xpose.msra.mxu0 0
      %1107 = vmatprep.mubr.bf16.mxu0 0
      %1108 = vmatmul.mubr.bf16.gmra.mrb[0].mxu0 %v1070
      %v1109 = vpop.f32.mrb[0].mxu0
      %v1110 = vadd.f32 %v775, %v1109
      %v1111 = vpop.f32.mrb[0].mxu0
      %v1112 = vpop.f32.mrb[0].mxu0
      %v1113 = vadd.f32 %v776, %v1112
      %v1114 = vpop.f32.mrb[0].mxu0
      %1115 = vdwg.mxu0
      %vm1116 = vcmask 130048
      %v1117 = vsel %vm1116, %v960, -inf
      %1118 = vmax.xlane.f32.xlu0 %v1117
      %v1119 = vpop.xlane.xlu0 %1118
      %v1120 = vsel %vm1116, %v963, -inf
      %1121 = vmax.xlane.f32.xlu0 %v1120
      %v1122 = vpop.xlane.xlu0 %1121
      %v1123 = vsel %vm1116, %v1010, -inf
      %1124 = vmax.xlane.f32.xlu0 %v1123
      %v1125 = vpop.xlane.xlu0 %1124
      %v1126 = vsel %vm1116, %v1013, -inf
      %1127 = vmax.xlane.f32.xlu0 %v1126
      %v1128 = vpop.xlane.xlu0 %1127
      %v1129 = vsel %vm1116, %v1060, -inf
      %1130 = vmax.xlane.f32.xlu0 %v1129
      %v1131 = vpop.xlane.xlu0 %1130
      %v1132 = vsel %vm1116, %v1063, -inf
      %1133 = vmax.xlane.f32.xlu0 %v1132
      %v1134 = vpop.xlane.xlu0 %1133
      %v1135 = vsel %vm1116, %v1110, -inf
      %1136 = vmax.xlane.f32.xlu0 %v1135
      %v1137 = vpop.xlane.xlu0 %1136
      %v1138 = vsel %vm1116, %v1113, -inf
      %1139 = vmax.xlane.f32.xlu0 %v1138
      %v1140 = vpop.xlane.xlu0 %1139
      %v1141 = vsub.f32 %v960, %v1119
      %v1142 = vsub.f32 %v963, %v1122
      %v1143 = vsub.f32 %v1010, %v1125
      %v1144 = vsub.f32 %v1013, %v1128
      %v1145 = vsub.f32 %v1060, %v1131
      %v1146 = vsub.f32 %v1063, %v1134
      %v1147 = vsub.f32 %v1110, %v1137
      %v1148 = vsub.f32 %v1113, %v1140
      %v1149 = vmul.f32 %v1141, 1.442695
      %v1150 = vpow.pop %v1149
      %v1151 = vmul.f32 %v1142, 1.442695
      %v1152 = vpow.pop %v1151
      %v1153 = vmul.f32 %v1143, 1.442695
      %v1154 = vpow.pop %v1153
      %v1155 = vmul.f32 %v1144, 1.442695
      %v1156 = vpow.pop %v1155
      %v1157 = vmul.f32 %v1145, 1.442695
      %v1158 = vpow.pop %v1157
      %v1159 = vmul.f32 %v1146, 1.442695
      %v1160 = vpow.pop %v1159
      %v1161 = vmul.f32 %v1147, 1.442695
      %v1162 = vpow.pop %v1161
      %v1163 = vmul.f32 %v1148, 1.442695
      %v1164 = vpow.pop %v1163
      %v1165 = vsel %vm1116, %v1150, 0.0
      %1166 = vadd.xlane.f32.xlu0 %v1165
      %v1167 = vpop.xlane.xlu0 %1166
      %v1168 = vsel %vm1116, %v1152, 0.0
      %1169 = vadd.xlane.f32.xlu0 %v1168
      %v1170 = vpop.xlane.xlu0 %1169
      %v1171 = vsel %vm1116, %v1154, 0.0
      %1172 = vadd.xlane.f32.xlu0 %v1171
      %v1173 = vpop.xlane.xlu0 %1172
      %v1174 = vsel %vm1116, %v1156, 0.0
      %1175 = vadd.xlane.f32.xlu0 %v1174
      %v1176 = vpop.xlane.xlu0 %1175
      %v1177 = vsel %vm1116, %v1158, 0.0
      %1178 = vadd.xlane.f32.xlu0 %v1177
      %v1179 = vpop.xlane.xlu0 %1178
      %v1180 = vsel %vm1116, %v1160, 0.0
      %1181 = vadd.xlane.f32.xlu0 %v1180
      %v1182 = vpop.xlane.xlu0 %1181
      %v1183 = vsel %vm1116, %v1162, 0.0
      %1184 = vadd.xlane.f32.xlu0 %v1183
      %v1185 = vpop.xlane.xlu0 %1184
      %v1186 = vsel %vm1116, %v1164, 0.0
      %1187 = vadd.xlane.f32.xlu0 %v1186
      %v1188 = vpop.xlane.xlu0 %1187
      %v1189 = vrcp.pop %v1167
      %v1190 = vrcp.pop %v1170
      %v1191 = vrcp.pop %v1173
      %v1192 = vrcp.pop %v1176
      %v1193 = vrcp.pop %v1179
      %v1194 = vrcp.pop %v1182
      %v1195 = vrcp.pop %v1185
      %v1196 = vrcp.pop %v1188
      %v1197 = vmul.f32 %v1150, %v1189
      %v1198 = vmul.f32 %v1152, %v1190
      %v1199 = vmul.f32 %v1154, %v1191
      %v1200 = vmul.f32 %v1156, %v1192
      %v1201 = vmul.f32 %v1158, %v1193
      %v1202 = vmul.f32 %v1160, %v1194
      %v1203 = vmul.f32 %v1162, %v1195
      %v1204 = vmul.f32 %v1164, %v1196
      %v1205 = vpack.c.bf16 %v1198, %v1197
      %v1206 = vpack.c.bf16 %v1200, %v1199
      %v1207 = vpack.c.bf16 %v1202, %v1201
      %v1208 = vpack.c.bf16 %v1204, %v1203
      %1209 = vrot.lane.b32.xlu0 %v911, 64
      %v1210 = vpop.permute.xlu0 %1209
      %v1213 = vsel %vm1116, %v1205, 0
      %1215 = vmatprep.subr.bf16.mxu0 0
      %1216 = vmatpush1.bf16.msra.mxu0 %v1210
      %1217 = vmatprep.subr.bf16.mxu0 0
      %1218 = vmatpush1.bf16.msra.mxu0 0
      %1219 = vmatprep.subr.bf16.mxu0 0
      %1220 = vmatpush1.bf16.msra.mxu0 0
      %1221 = vmatprep.subr.bf16.mxu0 0
      %1222 = vmatpush1.bf16.msra.mxu0 0
      %1223 = vmatprep.subr.bf16.mxu0 0
      %1224 = vmatpush1.bf16.msra.mxu0 0
      %1225 = vmatprep.subr.bf16.mxu0 0
      %1226 = vmatpush1.bf16.msra.mxu0 0
      %1227 = vmatprep.subr.bf16.mxu0 0
      %1228 = vmatpush1.bf16.msra.mxu0 0
      %1229 = vmatprep.subr.bf16.mxu0 0
      %1230 = vmatpush1.bf16.msra.mxu0 0
      %1231 = vmatprep.subr.bf16.mxu0 0
      %1232 = vmatpush1.bf16.msra.mxu0 0
      %1233 = vmatprep.subr.bf16.mxu0 0
      %1234 = vmatpush1.bf16.msra.mxu0 0
      %1235 = vmatprep.subr.bf16.mxu0 0
      %1236 = vmatpush1.bf16.msra.mxu0 0
      %1237 = vmatprep.subr.bf16.mxu0 0
      %1238 = vmatpush1.bf16.msra.mxu0 0
      %1239 = vmatprep.subr.bf16.mxu0 0
      %1240 = vmatpush1.bf16.msra.mxu0 0
      %1241 = vmatprep.subr.bf16.mxu0 0
      %1242 = vmatpush1.bf16.msra.mxu0 0
      %1243 = vmatprep.subr.bf16.mxu0 0
      %1244 = vmatpush1.bf16.msra.mxu0 0
      %1245 = vmatprep.subr.bf16.mxu0 0
      %1246 = vmatpush1.bf16.msra.mxu0 0
      %1247 = vmatprep.mubr.bf16.mxu0 0
      %1248 = vmatmul.mubr.bf16.gmra.mrb[0].mxu0 %v1213
      %v1249 = vpop.f32.mrb[0].mxu0
      %v1250 = vadd.f32 0.0, %v1249
      %v1251 = vpop.f32.mrb[0].mxu0
      %v1252 = vpop.f32.mrb[0].mxu0
      %v1253 = vadd.f32 0.0, %v1252
      %v1254 = vpop.f32.mrb[0].mxu0
      %1255 = vdwg.mxu0
      %1256 = vrot.lane.b32.xlu0 %v912, 64
      %v1257 = vpop.permute.xlu0 %1256
      %v1260 = vsel %vm1116, %v1206, 0
      %1262 = vmatprep.subr.bf16.mxu0 0
      %1263 = vmatpush1.bf16.msra.mxu0 %v1257
      %1264 = vmatprep.subr.bf16.mxu0 0
      %1265 = vmatpush1.bf16.msra.mxu0 0
      %1266 = vmatprep.subr.bf16.mxu0 0
      %1267 = vmatpush1.bf16.msra.mxu0 0
      %1268 = vmatprep.subr.bf16.mxu0 0
      %1269 = vmatpush1.bf16.msra.mxu0 0
      %1270 = vmatprep.subr.bf16.mxu0 0
      %1271 = vmatpush1.bf16.msra.mxu0 0
      %1272 = vmatprep.subr.bf16.mxu0 0
      %1273 = vmatpush1.bf16.msra.mxu0 0
      %1274 = vmatprep.subr.bf16.mxu0 0
      %1275 = vmatpush1.bf16.msra.mxu0 0
      %1276 = vmatprep.subr.bf16.mxu0 0
      %1277 = vmatpush1.bf16.msra.mxu0 0
      %1278 = vmatprep.subr.bf16.mxu0 0
      %1279 = vmatpush1.bf16.msra.mxu0 0
      %1280 = vmatprep.subr.bf16.mxu0 0
      %1281 = vmatpush1.bf16.msra.mxu0 0
      %1282 = vmatprep.subr.bf16.mxu0 0
      %1283 = vmatpush1.bf16.msra.mxu0 0
      %1284 = vmatprep.subr.bf16.mxu0 0
      %1285 = vmatpush1.bf16.msra.mxu0 0
      %1286 = vmatprep.subr.bf16.mxu0 0
      %1287 = vmatpush1.bf16.msra.mxu0 0
      %1288 = vmatprep.subr.bf16.mxu0 0
      %1289 = vmatpush1.bf16.msra.mxu0 0
      %1290 = vmatprep.subr.bf16.mxu0 0
      %1291 = vmatpush1.bf16.msra.mxu0 0
      %1292 = vmatprep.subr.bf16.mxu0 0
      %1293 = vmatpush1.bf16.msra.mxu0 0
      %1294 = vmatprep.mubr.bf16.mxu0 0
      %1295 = vmatmul.mubr.bf16.gmra.mrb[0].mxu0 %v1260
      %v1296 = vpop.f32.mrb[0].mxu0
      %v1297 = vadd.f32 0.0, %v1296
      %v1298 = vpop.f32.mrb[0].mxu0
      %v1299 = vpop.f32.mrb[0].mxu0
      %v1300 = vadd.f32 0.0, %v1299
      %v1301 = vpop.f32.mrb[0].mxu0
      %1302 = vdwg.mxu0
      %1303 = vrot.lane.b32.xlu0 %v913, 64
      %v1304 = vpop.permute.xlu0 %1303
      %v1307 = vsel %vm1116, %v1207, 0
      %1309 = vmatprep.subr.bf16.mxu0 0
      %1310 = vmatpush1.bf16.msra.mxu0 %v1304
      %1311 = vmatprep.subr.bf16.mxu0 0
      %1312 = vmatpush1.bf16.msra.mxu0 0
      %1313 = vmatprep.subr.bf16.mxu0 0
      %1314 = vmatpush1.bf16.msra.mxu0 0
      %1315 = vmatprep.subr.bf16.mxu0 0
      %1316 = vmatpush1.bf16.msra.mxu0 0
      %1317 = vmatprep.subr.bf16.mxu0 0
      %1318 = vmatpush1.bf16.msra.mxu0 0
      %1319 = vmatprep.subr.bf16.mxu0 0
      %1320 = vmatpush1.bf16.msra.mxu0 0
      %1321 = vmatprep.subr.bf16.mxu0 0
      %1322 = vmatpush1.bf16.msra.mxu0 0
      %1323 = vmatprep.subr.bf16.mxu0 0
      %1324 = vmatpush1.bf16.msra.mxu0 0
      %1325 = vmatprep.subr.bf16.mxu0 0
      %1326 = vmatpush1.bf16.msra.mxu0 0
      %1327 = vmatprep.subr.bf16.mxu0 0
      %1328 = vmatpush1.bf16.msra.mxu0 0
      %1329 = vmatprep.subr.bf16.mxu0 0
      %1330 = vmatpush1.bf16.msra.mxu0 0
      %1331 = vmatprep.subr.bf16.mxu0 0
      %1332 = vmatpush1.bf16.msra.mxu0 0
      %1333 = vmatprep.subr.bf16.mxu0 0
      %1334 = vmatpush1.bf16.msra.mxu0 0
      %1335 = vmatprep.subr.bf16.mxu0 0
      %1336 = vmatpush1.bf16.msra.mxu0 0
      %1337 = vmatprep.subr.bf16.mxu0 0
      %1338 = vmatpush1.bf16.msra.mxu0 0
      %1339 = vmatprep.subr.bf16.mxu0 0
      %1340 = vmatpush1.bf16.msra.mxu0 0
      %1341 = vmatprep.mubr.bf16.mxu0 0
      %1342 = vmatmul.mubr.bf16.gmra.mrb[0].mxu0 %v1307
      %v1343 = vpop.f32.mrb[0].mxu0
      %v1344 = vadd.f32 0.0, %v1343
      %v1345 = vpop.f32.mrb[0].mxu0
      %v1346 = vpop.f32.mrb[0].mxu0
      %v1347 = vadd.f32 0.0, %v1346
      %v1348 = vpop.f32.mrb[0].mxu0
      %1349 = vdwg.mxu0
      %1350 = vrot.lane.b32.xlu0 %v914, 64
      %v1351 = vpop.permute.xlu0 %1350
      %v1354 = vsel %vm1116, %v1208, 0
      %1356 = vmatprep.subr.bf16.mxu0 0
      %1357 = vmatpush1.bf16.msra.mxu0 %v1351
      %1358 = vmatprep.subr.bf16.mxu0 0
      %1359 = vmatpush1.bf16.msra.mxu0 0
      %1360 = vmatprep.subr.bf16.mxu0 0
      %1361 = vmatpush1.bf16.msra.mxu0 0
      %1362 = vmatprep.subr.bf16.mxu0 0
      %1363 = vmatpush1.bf16.msra.mxu0 0
      %1364 = vmatprep.subr.bf16.mxu0 0
      %1365 = vmatpush1.bf16.msra.mxu0 0
      %1366 = vmatprep.subr.bf16.mxu0 0
      %1367 = vmatpush1.bf16.msra.mxu0 0
      %1368 = vmatprep.subr.bf16.mxu0 0
      %1369 = vmatpush1.bf16.msra.mxu0 0
      %1370 = vmatprep.subr.bf16.mxu0 0
      %1371 = vmatpush1.bf16.msra.mxu0 0
      %1372 = vmatprep.subr.bf16.mxu0 0
      %1373 = vmatpush1.bf16.msra.mxu0 0
      %1374 = vmatprep.subr.bf16.mxu0 0
      %1375 = vmatpush1.bf16.msra.mxu0 0
      %1376 = vmatprep.subr.bf16.mxu0 0
      %1377 = vmatpush1.bf16.msra.mxu0 0
      %1378 = vmatprep.subr.bf16.mxu0 0
      %1379 = vmatpush1.bf16.msra.mxu0 0
      %1380 = vmatprep.subr.bf16.mxu0 0
      %1381 = vmatpush1.bf16.msra.mxu0 0
      %1382 = vmatprep.subr.bf16.mxu0 0
      %1383 = vmatpush1.bf16.msra.mxu0 0
      %1384 = vmatprep.subr.bf16.mxu0 0
      %1385 = vmatpush1.bf16.msra.mxu0 0
      %1386 = vmatprep.subr.bf16.mxu0 0
      %1387 = vmatpush1.bf16.msra.mxu0 0
      %1388 = vmatprep.mubr.bf16.mxu0 0
      %1389 = vmatmul.mubr.bf16.gmra.mrb[0].mxu0 %v1354
      %v1390 = vpop.f32.mrb[0].mxu0
      %v1391 = vadd.f32 0.0, %v1390
      %v1392 = vpop.f32.mrb[0].mxu0
      %v1393 = vpop.f32.mrb[0].mxu0
      %v1394 = vadd.f32 0.0, %v1393
      %v1395 = vpop.f32.mrb[0].mxu0
      %1396 = vdwg.mxu0
      %v1397 = vpack.c.bf16 %v1253, %v1250
      %v1398 = vpack.c.bf16 %v1300, %v1297
      %v1399 = vpack.c.bf16 %v1347, %v1344
      %v1400 = vpack.c.bf16 %v1394, %v1391
      %v1401 = vld [vmem:[%s734] sm:$0xf]
      %v1402 = vld [vmem:[%s734 + $0x4] sm:$0xf]
      %v1403 = vld [vmem:[%s734 + $0x8] sm:$0xf]
      %v1404 = vld [vmem:[%s734 + $0xc] sm:$0xf]
      %v1406 = vsel %vm918, %v1397, 0
      %vm1408 = vcmask 1043456
      %v1410 = vsel %vm1408, %v1401, 0
      %1412 = vmatprep.subr.bf16.mxu0 0
      %1413 = vmatpush1.bf16.msra.mxu0 %v1410
      %1414 = vmatprep.subr.bf16.mxu0 0
      %1415 = vmatpush1.bf16.msra.mxu0 0
      %1416 = vmatprep.subr.bf16.mxu0 0
      %1417 = vmatpush1.bf16.msra.mxu0 0
      %1418 = vmatprep.subr.bf16.mxu0 0
      %1419 = vmatpush1.bf16.msra.mxu0 0
      %1420 = vmatprep.subr.bf16.mxu0 0
      %1421 = vmatpush1.bf16.msra.mxu0 0
      %1422 = vmatprep.subr.bf16.mxu0 0
      %1423 = vmatpush1.bf16.msra.mxu0 0
      %1424 = vmatprep.subr.bf16.mxu0 0
      %1425 = vmatpush1.bf16.msra.mxu0 0
      %1426 = vmatprep.subr.bf16.mxu0 0
      %1427 = vmatpush1.bf16.msra.mxu0 0
      %1428 = vmatprep.subr.bf16.mxu0 0
      %1429 = vmatpush1.bf16.msra.mxu0 0
      %1430 = vmatprep.subr.bf16.mxu0 0
      %1431 = vmatpush1.bf16.msra.mxu0 0
      %1432 = vmatprep.subr.bf16.mxu0 0
      %1433 = vmatpush1.bf16.msra.mxu0 0
      %1434 = vmatprep.subr.bf16.mxu0 0
      %1435 = vmatpush1.bf16.msra.mxu0 0
      %1436 = vmatprep.subr.bf16.mxu0 0
      %1437 = vmatpush1.bf16.msra.mxu0 0
      %1438 = vmatprep.subr.bf16.mxu0 0
      %1439 = vmatpush1.bf16.msra.mxu0 0
      %1440 = vmatprep.subr.bf16.mxu0 0
      %1441 = vmatpush1.bf16.msra.mxu0 0
      %1442 = vmatprep.subr.bf16.mxu0 0
      %1443 = vmatpush1.bf16.msra.mxu0 0
      %1444 = vmatprep.mubr.bf16.mxu0 0
      %1445 = vmatmul.mubr.bf16.gmra.mrb[0].mxu0 %v1406
      %v1446 = vpop.f32.mrb[0].mxu0
      %v1447 = vadd.f32 0.0, %v1446
      %v1448 = vpop.f32.mrb[0].mxu0
      %v1449 = vpop.f32.mrb[0].mxu0
      %v1450 = vadd.f32 0.0, %v1449
      %v1451 = vpop.f32.mrb[0].mxu0
      %1452 = vdwg.mxu0
      %v1454 = vsel %vm918, %v1398, 0
      %v1457 = vsel %vm1408, %v1402, 0
      %1459 = vmatprep.subr.bf16.mxu0 0
      %1460 = vmatpush1.bf16.msra.mxu0 %v1457
      %1461 = vmatprep.subr.bf16.mxu0 0
      %1462 = vmatpush1.bf16.msra.mxu0 0
      %1463 = vmatprep.subr.bf16.mxu0 0
      %1464 = vmatpush1.bf16.msra.mxu0 0
      %1465 = vmatprep.subr.bf16.mxu0 0
      %1466 = vmatpush1.bf16.msra.mxu0 0
      %1467 = vmatprep.subr.bf16.mxu0 0
      %1468 = vmatpush1.bf16.msra.mxu0 0
      %1469 = vmatprep.subr.bf16.mxu0 0
      %1470 = vmatpush1.bf16.msra.mxu0 0
      %1471 = vmatprep.subr.bf16.mxu0 0
      %1472 = vmatpush1.bf16.msra.mxu0 0
      %1473 = vmatprep.subr.bf16.mxu0 0
      %1474 = vmatpush1.bf16.msra.mxu0 0
      %1475 = vmatprep.subr.bf16.mxu0 0
      %1476 = vmatpush1.bf16.msra.mxu0 0
      %1477 = vmatprep.subr.bf16.mxu0 0
      %1478 = vmatpush1.bf16.msra.mxu0 0
      %1479 = vmatprep.subr.bf16.mxu0 0
      %1480 = vmatpush1.bf16.msra.mxu0 0
      %1481 = vmatprep.subr.bf16.mxu0 0
      %1482 = vmatpush1.bf16.msra.mxu0 0
      %1483 = vmatprep.subr.bf16.mxu0 0
      %1484 = vmatpush1.bf16.msra.mxu0 0
      %1485 = vmatprep.subr.bf16.mxu0 0
      %1486 = vmatpush1.bf16.msra.mxu0 0
      %1487 = vmatprep.subr.bf16.mxu0 0
      %1488 = vmatpush1.bf16.msra.mxu0 0
      %1489 = vmatprep.subr.bf16.mxu0 0
      %1490 = vmatpush1.bf16.msra.mxu0 0
      %1491 = vmatprep.mubr.bf16.mxu0 0
      %1492 = vmatmul.mubr.bf16.gmra.mrb[0].mxu0 %v1454
      %v1493 = vpop.f32.mrb[0].mxu0
      %v1494 = vadd.f32 0.0, %v1493
      %v1495 = vpop.f32.mrb[0].mxu0
      %v1496 = vpop.f32.mrb[0].mxu0
      %v1497 = vadd.f32 0.0, %v1496
      %v1498 = vpop.f32.mrb[0].mxu0
      %1499 = vdwg.mxu0
      %v1501 = vsel %vm918, %v1399, 0
      %v1504 = vsel %vm1408, %v1403, 0
      %1506 = vmatprep.subr.bf16.mxu0 0
      %1507 = vmatpush1.bf16.msra.mxu0 %v1504
      %1508 = vmatprep.subr.bf16.mxu0 0
      %1509 = vmatpush1.bf16.msra.mxu0 0
      %1510 = vmatprep.subr.bf16.mxu0 0
      %1511 = vmatpush1.bf16.msra.mxu0 0
      %1512 = vmatprep.subr.bf16.mxu0 0
      %1513 = vmatpush1.bf16.msra.mxu0 0
      %1514 = vmatprep.subr.bf16.mxu0 0
      %1515 = vmatpush1.bf16.msra.mxu0 0
      %1516 = vmatprep.subr.bf16.mxu0 0
      %1517 = vmatpush1.bf16.msra.mxu0 0
      %1518 = vmatprep.subr.bf16.mxu0 0
      %1519 = vmatpush1.bf16.msra.mxu0 0
      %1520 = vmatprep.subr.bf16.mxu0 0
      %1521 = vmatpush1.bf16.msra.mxu0 0
      %1522 = vmatprep.subr.bf16.mxu0 0
      %1523 = vmatpush1.bf16.msra.mxu0 0
      %1524 = vmatprep.subr.bf16.mxu0 0
      %1525 = vmatpush1.bf16.msra.mxu0 0
      %1526 = vmatprep.subr.bf16.mxu0 0
      %1527 = vmatpush1.bf16.msra.mxu0 0
      %1528 = vmatprep.subr.bf16.mxu0 0
      %1529 = vmatpush1.bf16.msra.mxu0 0
      %1530 = vmatprep.subr.bf16.mxu0 0
      %1531 = vmatpush1.bf16.msra.mxu0 0
      %1532 = vmatprep.subr.bf16.mxu0 0
      %1533 = vmatpush1.bf16.msra.mxu0 0
      %1534 = vmatprep.subr.bf16.mxu0 0
      %1535 = vmatpush1.bf16.msra.mxu0 0
      %1536 = vmatprep.subr.bf16.mxu0 0
      %1537 = vmatpush1.bf16.msra.mxu0 0
      %1538 = vmatprep.mubr.bf16.mxu0 0
      %1539 = vmatmul.mubr.bf16.gmra.mrb[0].mxu0 %v1501
      %v1540 = vpop.f32.mrb[0].mxu0
      %v1541 = vadd.f32 0.0, %v1540
      %v1542 = vpop.f32.mrb[0].mxu0
      %v1543 = vpop.f32.mrb[0].mxu0
      %v1544 = vadd.f32 0.0, %v1543
      %v1545 = vpop.f32.mrb[0].mxu0
      %1546 = vdwg.mxu0
      %v1548 = vsel %vm918, %v1400, 0
      %v1551 = vsel %vm1408, %v1404, 0
      %1553 = vmatprep.subr.bf16.mxu0 0
      %1554 = vmatpush1.bf16.msra.mxu0 %v1551
      %1555 = vmatprep.subr.bf16.mxu0 0
      %1556 = vmatpush1.bf16.msra.mxu0 0
      %1557 = vmatprep.subr.bf16.mxu0 0
      %1558 = vmatpush1.bf16.msra.mxu0 0
      %1559 = vmatprep.subr.bf16.mxu0 0
      %1560 = vmatpush1.bf16.msra.mxu0 0
      %1561 = vmatprep.subr.bf16.mxu0 0
      %1562 = vmatpush1.bf16.msra.mxu0 0
      %1563 = vmatprep.subr.bf16.mxu0 0
      %1564 = vmatpush1.bf16.msra.mxu0 0
      %1565 = vmatprep.subr.bf16.mxu0 0
      %1566 = vmatpush1.bf16.msra.mxu0 0
      %1567 = vmatprep.subr.bf16.mxu0 0
      %1568 = vmatpush1.bf16.msra.mxu0 0
      %1569 = vmatprep.subr.bf16.mxu0 0
      %1570 = vmatpush1.bf16.msra.mxu0 0
      %1571 = vmatprep.subr.bf16.mxu0 0
      %1572 = vmatpush1.bf16.msra.mxu0 0
      %1573 = vmatprep.subr.bf16.mxu0 0
      %1574 = vmatpush1.bf16.msra.mxu0 0
      %1575 = vmatprep.subr.bf16.mxu0 0
      %1576 = vmatpush1.bf16.msra.mxu0 0
      %1577 = vmatprep.subr.bf16.mxu0 0
      %1578 = vmatpush1.bf16.msra.mxu0 0
      %1579 = vmatprep.subr.bf16.mxu0 0
      %1580 = vmatpush1.bf16.msra.mxu0 0
      %1581 = vmatprep.subr.bf16.mxu0 0
      %1582 = vmatpush1.bf16.msra.mxu0 0
      %1583 = vmatprep.subr.bf16.mxu0 0
      %1584 = vmatpush1.bf16.msra.mxu0 0
      %1585 = vmatprep.mubr.bf16.mxu0 0
      %1586 = vmatmul.mubr.bf16.gmra.mrb[0].mxu0 %v1548
      %v1587 = vpop.f32.mrb[0].mxu0
      %v1588 = vadd.f32 0.0, %v1587
      %v1589 = vpop.f32.mrb[0].mxu0
      %v1590 = vpop.f32.mrb[0].mxu0
      %v1591 = vadd.f32 0.0, %v1590
      %v1592 = vpop.f32.mrb[0].mxu0
      %1593 = vdwg.mxu0
      %v1594 = vsel %vm779, %v1447, 0.0
      %v1595 = vsel %vm779, %v1494, 0.0
      %v1596 = vadd.f32 %v1594, %v1595
      %v1597 = vsel %vm779, %v1541, 0.0
      %v1598 = vadd.f32 %v1596, %v1597
      %v1599 = vsel %vm779, %v1588, 0.0
      %v1600 = vadd.f32 %v1598, %v1599
      %v1601 = vsel %vm779, %v1450, 0.0
      %v1602 = vsel %vm779, %v1497, 0.0
      %v1603 = vadd.f32 %v1601, %v1602
      %v1604 = vsel %vm779, %v1544, 0.0
      %v1605 = vadd.f32 %v1603, %v1604
      %v1606 = vsel %vm779, %v1591, 0.0
      %v1607 = vadd.f32 %v1605, %v1606
      %v1608 = vadd.f32 %v772, %v1600
      %v1609 = vadd.f32 %v773, %v1607
      %v1610 = vld [vmem:[%s737] sm:$0x1]
      %v1612 = vlaneseq
      %v1613 = vshrl.u32 %v1612, 7
      %v1614 = vsub.s32 0, %v1613
      %v1615 = vrot.slane %v1610, %v1614
      %v1617 = vadd.f32 %v1608, %v1615
      %v1618 = vadd.f32 %v1609, %v1615
      %v1619 = vsel %vm1116, %v1197, 0.0
      %v1620 = vsel %vm1116, %v1199, 0.0
      %v1621 = vadd.f32 %v1619, %v1620
      %v1622 = vsel %vm1116, %v1201, 0.0
      %v1623 = vadd.f32 %v1621, %v1622
      %v1624 = vsel %vm1116, %v1203, 0.0
      %v1625 = vadd.f32 %v1623, %v1624
      %v1626 = vsel %vm1116, %v1198, 0.0
      %v1627 = vsel %vm1116, %v1200, 0.0
      %v1628 = vadd.f32 %v1626, %v1627
      %v1629 = vsel %vm1116, %v1202, 0.0
      %v1630 = vadd.f32 %v1628, %v1629
      %v1631 = vsel %vm1116, %v1204, 0.0
      %v1632 = vadd.f32 %v1630, %v1631
      %v1633 = vrcp.pop 4.0
      %v1634 = vmul.f32 %v1625, %v1633
      %v1635 = vmul.f32 %v1632, %v1633
      %v1637 = vsel %vm1116, %v774, 0
      %1639 = vmatprep.subr.mxu0 0.0
      %1640 = vmatpush1.msra.mxu0 %v1634
      %1641 = vmatprep.subr.mxu0 0.0
      %1642 = vmatpush1.msra.mxu0 %v1635
      %1643 = vmatprep.subr.mxu0 0.0
      %1644 = vmatpush1.msra.mxu0 0.0
      %1645 = vmatprep.subr.mxu0 0.0
      %1646 = vmatpush1.msra.mxu0 0.0
      %1647 = vmatprep.subr.mxu0 0.0
      %1648 = vmatpush1.msra.mxu0 0.0
      %1649 = vmatprep.subr.mxu0 0.0
      %1650 = vmatpush1.msra.mxu0 0.0
      %1651 = vmatprep.subr.mxu0 0.0
      %1652 = vmatpush1.msra.mxu0 0.0
      %1653 = vmatprep.subr.mxu0 0.0
      %1654 = vmatpush1.msra.mxu0 0.0
      %1655 = vmatprep.subr.mxu0 0.0
      %1656 = vmatpush1.msra.mxu0 0.0
      %1657 = vmatprep.subr.mxu0 0.0
      %1658 = vmatpush1.msra.mxu0 0.0
      %1659 = vmatprep.subr.mxu0 0.0
      %1660 = vmatpush1.msra.mxu0 0.0
      %1661 = vmatprep.subr.mxu0 0.0
      %1662 = vmatpush1.msra.mxu0 0.0
      %1663 = vmatprep.subr.mxu0 0.0
      %1664 = vmatpush1.msra.mxu0 0.0
      %1665 = vmatprep.subr.mxu0 0.0
      %1666 = vmatpush1.msra.mxu0 0.0
      %1667 = vmatprep.subr.mxu0 0.0
      %1668 = vmatpush1.msra.mxu0 0.0
      %1669 = vmatprep.subr.mxu0 0.0
      %1670 = vmatpush1.msra.mxu0 0.0
      %1671 = vmatprep.subr.mxu0 0.0
      %1672 = vmatpush1.msra.mxu0 0.0
      %1673 = vmatprep.subr.mxu0 0.0
      %1674 = vmatpush1.msra.mxu0 0.0
      %1675 = vmatprep.subr.mxu0 0.0
      %1676 = vmatpush1.msra.mxu0 0.0
      %1677 = vmatprep.subr.mxu0 0.0
      %1678 = vmatpush1.msra.mxu0 0.0
      %1679 = vmatprep.subr.mxu0 0.0
      %1680 = vmatpush1.msra.mxu0 0.0
      %1681 = vmatprep.subr.mxu0 0.0
      %1682 = vmatpush1.msra.mxu0 0.0
      %1683 = vmatprep.subr.mxu0 0.0
      %1684 = vmatpush1.msra.mxu0 0.0
      %1685 = vmatprep.subr.mxu0 0.0
      %1686 = vmatpush1.msra.mxu0 0.0
      %1687 = vmatprep.subr.mxu0 0.0
      %1688 = vmatpush1.msra.mxu0 0.0
      %1689 = vmatprep.subr.mxu0 0.0
      %1690 = vmatpush1.msra.mxu0 0.0
      %1691 = vmatprep.subr.mxu0 0.0
      %1692 = vmatpush1.msra.mxu0 0.0
      %1693 = vmatprep.subr.mxu0 0.0
      %1694 = vmatpush1.msra.mxu0 0.0
      %1695 = vmatprep.subr.mxu0 0.0
      %1696 = vmatpush1.msra.mxu0 0.0
      %1697 = vmatprep.subr.mxu0 0.0
      %1698 = vmatpush1.msra.mxu0 0.0
      %1699 = vmatprep.subr.mxu0 0.0
      %1700 = vmatpush1.msra.mxu0 0.0
      %1701 = vmatprep.subr.mxu0 0.0
      %1702 = vmatpush1.msra.mxu0 0.0
      %1703 = vmatprep.mubr.f32.mxu0 0.0
      %1704 = vmatmul.mubr.f32.gmra.mrb[0].mxu0 %v1637
      %v1705 = vpop.f32.mrb[0].mxu0
      %v1706 = vadd.f32 0.0, %v1705
      %v1707 = vpop.f32.mrb[0].mxu0
      %1708 = vdwg.mxu0
      %v1709 = vld [vmem:[#allocation3] sm:$0x3]
      %v1710 = vld [vmem:[%s3] sm:$0xff]
      %v1711 = vld [vmem:[%s3 + $0x8] sm:$0xff]
      %v1713 = vsel %vm1116, %v1706, 0
      %1715 = vmatprep.subr.mxu0 0.0
      %1716 = vmatpush1.msra.mxu0 %v1710
      %1717 = vmatprep.subr.mxu0 0.0
      %1718 = vmatpush1.msra.mxu0 %v1711
      %1719 = vmatprep.subr.mxu0 0.0
      %1720 = vmatpush1.msra.mxu0 0.0
      %1721 = vmatprep.subr.mxu0 0.0
      %1722 = vmatpush1.msra.mxu0 0.0
      %1723 = vmatprep.subr.mxu0 0.0
      %1724 = vmatpush1.msra.mxu0 0.0
      %1725 = vmatprep.subr.mxu0 0.0
      %1726 = vmatpush1.msra.mxu0 0.0
      %1727 = vmatprep.subr.mxu0 0.0
      %1728 = vmatpush1.msra.mxu0 0.0
      %1729 = vmatprep.subr.mxu0 0.0
      %1730 = vmatpush1.msra.mxu0 0.0
      %1731 = vmatprep.subr.mxu0 0.0
      %1732 = vmatpush1.msra.mxu0 0.0
      %1733 = vmatprep.subr.mxu0 0.0
      %1734 = vmatpush1.msra.mxu0 0.0
      %1735 = vmatprep.subr.mxu0 0.0
      %1736 = vmatpush1.msra.mxu0 0.0
      %1737 = vmatprep.subr.mxu0 0.0
      %1738 = vmatpush1.msra.mxu0 0.0
      %1739 = vmatprep.subr.mxu0 0.0
      %1740 = vmatpush1.msra.mxu0 0.0
      %1741 = vmatprep.subr.mxu0 0.0
      %1742 = vmatpush1.msra.mxu0 0.0
      %1743 = vmatprep.subr.mxu0 0.0
      %1744 = vmatpush1.msra.mxu0 0.0
      %1745 = vmatprep.subr.mxu0 0.0
      %1746 = vmatpush1.msra.mxu0 0.0
      %1747 = vmatprep.subr.mxu0 0.0
      %1748 = vmatpush1.msra.mxu0 0.0
      %1749 = vmatprep.subr.mxu0 0.0
      %1750 = vmatpush1.msra.mxu0 0.0
      %1751 = vmatprep.subr.mxu0 0.0
      %1752 = vmatpush1.msra.mxu0 0.0
      %1753 = vmatprep.subr.mxu0 0.0
      %1754 = vmatpush1.msra.mxu0 0.0
      %1755 = vmatprep.subr.mxu0 0.0
      %1756 = vmatpush1.msra.mxu0 0.0
      %1757 = vmatprep.subr.mxu0 0.0
      %1758 = vmatpush1.msra.mxu0 0.0
      %1759 = vmatprep.subr.mxu0 0.0
      %1760 = vmatpush1.msra.mxu0 0.0
      %1761 = vmatprep.subr.mxu0 0.0
      %1762 = vmatpush1.msra.mxu0 0.0
      %1763 = vmatprep.subr.mxu0 0.0
      %1764 = vmatpush1.msra.mxu0 0.0
      %1765 = vmatprep.subr.mxu0 0.0
      %1766 = vmatpush1.msra.mxu0 0.0
      %1767 = vmatprep.subr.mxu0 0.0
      %1768 = vmatpush1.msra.mxu0 0.0
      %1769 = vmatprep.subr.mxu0 0.0
      %1770 = vmatpush1.msra.mxu0 0.0
      %1771 = vmatprep.subr.mxu0 0.0
      %1772 = vmatpush1.msra.mxu0 0.0
      %1773 = vmatprep.subr.mxu0 0.0
      %1774 = vmatpush1.msra.mxu0 0.0
      %1775 = vmatprep.subr.mxu0 0.0
      %1776 = vmatpush1.msra.mxu0 0.0
      %1777 = vmatprep.subr.mxu0 0.0
      %1778 = vmatpush1.msra.mxu0 0.0
      %1779 = vmatprep.mubr.f32.mxu0 0.0
      %1780 = vmatmul.mubr.f32.gmra.mrb[0].mxu0 %v1713
      %v1781 = vpop.f32.mrb[0].mxu0
      %v1782 = vadd.f32 0.0, %v1781
      %v1783 = vpop.f32.mrb[0].mxu0
      %1784 = vdwg.mxu0
      %v1785 = vadd.f32 %v1709, %v1782
      %vm1786 = vcmask 58368
      %1787 = vst.msk [vmem:[#allocation3] sm:$0x3] %vm1786, %v1785
      %v1788 = vld [vmem:[%s740] sm:$0x1]
      %v1789 = vld [vmem:[%s743] sm:$0x1]
      %v1790 = vsel %vm779, %v1617, 0.0
      %1791 = vadd.xlane.f32.xlu0 %v1790
      %v1792 = vpop.xlane.xlu0 %1791
      %v1793 = vsel %vm779, %v1618, 0.0
      %1794 = vadd.xlane.f32.xlu0 %v1793
      %v1795 = vpop.xlane.xlu0 %1794
      %v1796 = vmul.f32 %v1792, %v786
      %v1797 = vmul.f32 %v1795, %v786
      %v1798 = vsub.f32 %v1617, %v1796
      %v1799 = vsub.f32 %v1618, %v1797
      %v1800 = vmul.f32 %v1798, %v1798
      %v1801 = vmul.f32 %v1799, %v1799
      %v1802 = vsel %vm779, %v1800, 0.0
      %1803 = vadd.xlane.f32.xlu0 %v1802
      %v1804 = vpop.xlane.xlu0 %1803
      %v1805 = vsel %vm779, %v1801, 0.0
      %1806 = vadd.xlane.f32.xlu0 %v1805
      %v1807 = vpop.xlane.xlu0 %1806
      %v1808 = vmul.f32 %v1804, %v786
      %v1809 = vmul.f32 %v1807, %v786
      %v1810 = vadd.f32 %v1808, 1e-05
      %v1811 = vadd.f32 %v1809, 1e-05
      %v1812 = vrsqrt.pop %v1810
      %v1813 = vrsqrt.pop %v1811
      %v1814 = vmul.f32 %v1798, %v1812
      %v1815 = vmul.f32 %v1799, %v1813
      %v1817 = vlaneseq
      %v1818 = vshrl.u32 %v1817, 7
      %v1819 = vsub.s32 0, %v1818
      %v1820 = vrot.slane %v1788, %v1819
      %v1822 = vmul.f32 %v1814, %v1820
      %v1823 = vmul.f32 %v1815, %v1820
      %v1825 = vlaneseq
      %v1826 = vshrl.u32 %v1825, 7
      %v1827 = vsub.s32 0, %v1826
      %v1828 = vrot.slane %v1789, %v1827
      %v1830 = vadd.f32 %v1822, %v1828
      %v1831 = vadd.f32 %v1823, %v1828
      %v1832 = vpack.c.bf16 %v1831, %v1830
      %v1833 = vld [vmem:[%s748] sm:$0xf]
      %v1834 = vld [vmem:[%s748 + $0x4] sm:$0xf]
      %v1835 = vld [vmem:[%s748 + $0x8] sm:$0xf]
      %v1836 = vld [vmem:[%s748 + $0xc] sm:$0xf]
      %v1837 = vld [vmem:[%s751] sm:$0x1]
      %v1839 = vlaneseq
      %v1840 = vshrl.u32 %v1839, 7
      %v1841 = vsub.s32 0, %v1840
      %v1842 = vrot.slane %v1837, %v1841
      %v1848 = vunpack.c.l.b16 %v1833
      %v1849 = vunpack.c.l.b16 %v1834
      %v1850 = vunpack.c.l.b16 %v1835
      %v1851 = vunpack.c.l.b16 %v1836
      %v1852 = vpack.c.b16 %v1849, %v1848
      %v1853 = vpack.c.b16 %v1851, %v1850
      %v1857 = vsel %vm779, %v1832, 0
      %1859 = vmatprep.subr.bf16.mxu0 0
      %1860 = vmatpush1.bf16.msra.mxu0 %v1852
      %1861 = vmatprep.subr.bf16.mxu0 0
      %1862 = vmatpush1.bf16.msra.mxu0 %v1853
      %1863 = vmatprep.subr.bf16.mxu0 0
      %1864 = vmatpush1.bf16.msra.mxu0 0
      %1865 = vmatprep.subr.bf16.mxu0 0
      %1866 = vmatpush1.bf16.msra.mxu0 0
      %1867 = vmatprep.subr.bf16.mxu0 0
      %1868 = vmatpush1.bf16.msra.mxu0 0
      %1869 = vmatprep.subr.bf16.mxu0 0
      %1870 = vmatpush1.bf16.msra.mxu0 0
      %1871 = vmatprep.subr.bf16.mxu0 0
      %1872 = vmatpush1.bf16.msra.mxu0 0
      %1873 = vmatprep.subr.bf16.mxu0 0
      %1874 = vmatpush1.bf16.msra.mxu0 0
      %1875 = vmatprep.subr.bf16.mxu0 0
      %1876 = vmatpush1.bf16.msra.mxu0 0
      %1877 = vmatprep.subr.bf16.mxu0 0
      %1878 = vmatpush1.bf16.msra.mxu0 0
      %1879 = vmatprep.subr.bf16.mxu0 0
      %1880 = vmatpush1.bf16.msra.mxu0 0
      %1881 = vmatprep.subr.bf16.mxu0 0
      %1882 = vmatpush1.bf16.msra.mxu0 0
      %1883 = vmatprep.subr.bf16.mxu0 0
      %1884 = vmatpush1.bf16.msra.mxu0 0
      %1885 = vmatprep.subr.bf16.mxu0 0
      %1886 = vmatpush1.bf16.msra.mxu0 0
      %1887 = vmatprep.subr.bf16.mxu0 0
      %1888 = vmatpush1.bf16.msra.mxu0 0
      %1889 = vmatprep.subr.bf16.mxu0 0
      %1890 = vmatpush1.bf16.msra.mxu0 0
      %1891 = vmatprep.mubr.bf16.mxu0 0
      %1892 = vmatmul.mubr.bf16.gmra.mrb[0].mxu0 %v1857
      %v1893 = vpop.f32.mrb[0].mxu0
      %v1894 = vadd.f32 %v1842, %v1893
      %v1895 = vpop.f32.mrb[0].mxu0
      %v1896 = vpop.f32.mrb[0].mxu0
      %v1897 = vadd.f32 %v1842, %v1896
      %v1898 = vpop.f32.mrb[0].mxu0
      %1899 = vdwg.mxu0
      %v1900 = vmul.f32 %v1894, 1.702
      %v1901 = vmul.f32 %v1897, 1.702
      %v1902 = vxor.u32 %v1900, 2147483648
      %v1903 = vxor.u32 %v1901, 2147483648
      %v1904 = vmul.f32 %v1902, 1.442695
      %v1905 = vpow.pop %v1904
      %v1906 = vmul.f32 %v1903, 1.442695
      %v1907 = vpow.pop %v1906
      %v1908 = vadd.f32 %v1905, 1.0
      %v1909 = vadd.f32 %v1907, 1.0
      %v1910 = vrcp.pop %v1908
      %v1911 = vmul.f32 1.0, %v1910
      %v1912 = vrcp.pop %v1909
      %v1913 = vmul.f32 1.0, %v1912
      %v1914 = vmul.f32 %v1894, %v1911
      %v1915 = vmul.f32 %v1897, %v1913
      %v1916 = vpack.c.bf16 %v1915, %v1914
      %v1917 = vld [vmem:[%s756] sm:$0xf]
      %v1918 = vld [vmem:[%s756 + $0x4] sm:$0xf]
      %v1919 = vld [vmem:[%s756 + $0x8] sm:$0xf]
      %v1920 = vld [vmem:[%s756 + $0xc] sm:$0xf]
      %v1921 = vld [vmem:[%s756 + $0x10] sm:$0xf]
      %v1922 = vld [vmem:[%s756 + $0x14] sm:$0xf]
      %v1923 = vld [vmem:[%s756 + $0x18] sm:$0xf]
      %v1924 = vld [vmem:[%s756 + $0x1c] sm:$0xf]
      %v1925 = vld [vmem:[%s756 + $0x20] sm:$0xf]
      %v1926 = vld [vmem:[%s756 + $0x24] sm:$0xf]
      %v1927 = vld [vmem:[%s756 + $0x28] sm:$0xf]
      %v1928 = vld [vmem:[%s756 + $0x2c] sm:$0xf]
      %v1929 = vld [vmem:[%s756 + $0x30] sm:$0xf]
      %v1930 = vld [vmem:[%s756 + $0x34] sm:$0xf]
      %v1931 = vld [vmem:[%s756 + $0x38] sm:$0xf]
      %v1932 = vld [vmem:[%s756 + $0x3c] sm:$0xf]
      %v1933 = vld [vmem:[%s759] sm:$0x1]
      %v1935 = vlaneseq
      %v1936 = vshrl.u32 %v1935, 7
      %v1937 = vsub.s32 0, %v1936
      %v1938 = vrot.slane %v1933, %v1937
      %v1956 = vunpack.c.l.b16 %v1917
      %v1957 = vunpack.c.l.b16 %v1918
      %v1958 = vunpack.c.l.b16 %v1919
      %v1959 = vunpack.c.l.b16 %v1920
      %v1960 = vunpack.c.l.b16 %v1921
      %v1961 = vunpack.c.l.b16 %v1922
      %v1962 = vunpack.c.l.b16 %v1923
      %v1963 = vunpack.c.l.b16 %v1924
      %v1964 = vunpack.c.l.b16 %v1925
      %v1965 = vunpack.c.l.b16 %v1926
      %v1966 = vunpack.c.l.b16 %v1927
      %v1967 = vunpack.c.l.b16 %v1928
      %v1968 = vunpack.c.l.b16 %v1929
      %v1969 = vunpack.c.l.b16 %v1930
      %v1970 = vunpack.c.l.b16 %v1931
      %v1971 = vunpack.c.l.b16 %v1932
      %v1972 = vpack.c.b16 %v1957, %v1956
      %v1973 = vpack.c.b16 %v1959, %v1958
      %v1974 = vpack.c.b16 %v1961, %v1960
      %v1975 = vpack.c.b16 %v1963, %v1962
      %v1976 = vpack.c.b16 %v1965, %v1964
      %v1977 = vpack.c.b16 %v1967, %v1966
      %v1978 = vpack.c.b16 %v1969, %v1968
      %v1979 = vpack.c.b16 %v1971, %v1970
      %1988 = vmatprep.subr.bf16.mxu0 0
      %1989 = vmatpush1.bf16.msra.mxu0 %v1972
      %1990 = vmatprep.subr.bf16.mxu0 0
      %1991 = vmatpush1.bf16.msra.mxu0 %v1973
      %1992 = vmatprep.subr.bf16.mxu0 0
      %1993 = vmatpush1.bf16.msra.mxu0 %v1974
      %1994 = vmatprep.subr.bf16.mxu0 0
      %1995 = vmatpush1.bf16.msra.mxu0 %v1975
      %1996 = vmatprep.subr.bf16.mxu0 0
      %1997 = vmatpush1.bf16.msra.mxu0 %v1976
      %1998 = vmatprep.subr.bf16.mxu0 0
      %1999 = vmatpush1.bf16.msra.mxu0 %v1977
      %2000 = vmatprep.subr.bf16.mxu0 0
      %2001 = vmatpush1.bf16.msra.mxu0 %v1978
      %2002 = vmatprep.subr.bf16.mxu0 0
      %2003 = vmatpush1.bf16.msra.mxu0 %v1979
      %2004 = vmatprep.subr.bf16.mxu0 0
      %2005 = vmatpush1.bf16.msra.mxu0 0
      %2006 = vmatprep.subr.bf16.mxu0 0
      %2007 = vmatpush1.bf16.msra.mxu0 0
      %2008 = vmatprep.subr.bf16.mxu0 0
      %2009 = vmatpush1.bf16.msra.mxu0 0
      %2010 = vmatprep.subr.bf16.mxu0 0
      %2011 = vmatpush1.bf16.msra.mxu0 0
      %2012 = vmatprep.subr.bf16.mxu0 0
      %2013 = vmatpush1.bf16.msra.mxu0 0
      %2014 = vmatprep.subr.bf16.mxu0 0
      %2015 = vmatpush1.bf16.msra.mxu0 0
      %2016 = vmatprep.subr.bf16.mxu0 0
      %2017 = vmatpush1.bf16.msra.mxu0 0
      %2018 = vmatprep.subr.bf16.mxu0 0
      %2019 = vmatpush1.bf16.msra.mxu0 0
      %2020 = vmatprep.mubr.bf16.mxu0 0
      %2021 = vmatmul.mubr.bf16.gmra.mrb[0].mxu0 %v1916
      %v2022 = vpop.f32.mrb[0].mxu0
      %v2023 = vadd.f32 %v1938, %v2022
      %v2024 = vpop.f32.mrb[0].mxu0
      %v2025 = vpop.f32.mrb[0].mxu0
      %v2026 = vadd.f32 %v1938, %v2025
      %v2027 = vpop.f32.mrb[0].mxu0
      %2028 = vdwg.mxu0
      %v2029 = vadd.f32 %v1617, %v2023
      %v2030 = vadd.f32 %v1618, %v2026
      %2031 = vst.msk [vmem:[#allocation2] sm:$0xff] %vm779, %v2029
      %2032 = vst.msk [vmem:[#allocation2 + $0x8] sm:$0xff] %vm779, %v2030
      %p2033 = scmp.eq.s32.totalorder %s30, 1
      // Predicated region
      $region101: #{exposed_text_encoder.1} parent=95 // pred_check
        %p2034 = pneg %p2033
      $region102: #{exposed_text_encoder.1} parent=95 // pred_check_branch
        %2036 = sbr.rel (%p2034) target = $region104
      $region103: #{exposed_text_encoder.1} parent=95 // pred_region
        %v2037 = vld [vmem:[%s16] sm:$0x1]
        %v2038 = vld [vmem:[%s17] sm:$0x1]
        %v2039 = vsel %vm779, %v2029, 0.0
        %2040 = vadd.xlane.f32.xlu0 %v2039
        %v2041 = vpop.xlane.xlu0 %2040
        %v2042 = vsel %vm779, %v2030, 0.0
        %2043 = vadd.xlane.f32.xlu0 %v2042
        %v2044 = vpop.xlane.xlu0 %2043
        %v2045 = vmul.f32 %v2041, %v786
        %v2046 = vmul.f32 %v2044, %v786
        %v2047 = vsub.f32 %v2029, %v2045
        %v2048 = vsub.f32 %v2030, %v2046
        %v2049 = vmul.f32 %v2047, %v2047
        %v2050 = vmul.f32 %v2048, %v2048
        %v2051 = vsel %vm779, %v2049, 0.0
        %2052 = vadd.xlane.f32.xlu0 %v2051
        %v2053 = vpop.xlane.xlu0 %2052
        %v2054 = vsel %vm779, %v2050, 0.0
        %2055 = vadd.xlane.f32.xlu0 %v2054
        %v2056 = vpop.xlane.xlu0 %2055
        %v2057 = vmul.f32 %v2053, %v786
        %v2058 = vmul.f32 %v2056, %v786
        %v2059 = vadd.f32 %v2057, 1e-05
        %v2060 = vadd.f32 %v2058, 1e-05
        %v2061 = vrsqrt.pop %v2059
        %v2062 = vrsqrt.pop %v2060
        %v2063 = vmul.f32 %v2047, %v2061
        %v2064 = vmul.f32 %v2048, %v2062
        %v2066 = vlaneseq
        %v2067 = vshrl.u32 %v2066, 7
        %v2068 = vsub.s32 0, %v2067
        %v2069 = vrot.slane %v2037, %v2068
        %v2071 = vmul.f32 %v2063, %v2069
        %v2072 = vmul.f32 %v2064, %v2069
        %v2074 = vlaneseq
        %v2075 = vshrl.u32 %v2074, 7
        %v2076 = vsub.s32 0, %v2075
        %v2077 = vrot.slane %v2038, %v2076
        %v2079 = vadd.f32 %v2071, %v2077
        %v2080 = vadd.f32 %v2072, %v2077
        %2081 = vmatprep.subr.mxu0 0.0
        %2082 = vmatpush1.msra.mxu0 %v2079
        %2083 = vmatprep.subr.mxu0 0.0
        %2084 = vmatpush1.msra.mxu0 %v2080
        %2085 = vmatprep.subr.mxu0 0.0
        %2086 = vmatpush1.msra.mxu0 0.0
        %2087 = vmatprep.subr.mxu0 0.0
        %2088 = vmatpush1.msra.mxu0 0.0
        %2089 = vmatprep.subr.mxu0 0.0
        %2090 = vmatpush1.msra.mxu0 0.0
        %2091 = vmatprep.subr.mxu0 0.0
        %2092 = vmatpush1.msra.mxu0 0.0
        %2093 = vmatprep.subr.mxu0 0.0
        %2094 = vmatpush1.msra.mxu0 0.0
        %2095 = vmatprep.subr.mxu0 0.0
        %2096 = vmatpush1.msra.mxu0 0.0
        %2097 = vmatprep.subr.mxu0 0.0
        %2098 = vmatpush1.msra.mxu0 0.0
        %2099 = vmatprep.subr.mxu0 0.0
        %2100 = vmatpush1.msra.mxu0 0.0
        %2101 = vmatprep.subr.mxu0 0.0
        %2102 = vmatpush1.msra.mxu0 0.0
        %2103 = vmatprep.subr.mxu0 0.0
        %2104 = vmatpush1.msra.mxu0 0.0
        %2105 = vmatprep.subr.mxu0 0.0
        %2106 = vmatpush1.msra.mxu0 0.0
        %2107 = vmatprep.subr.mxu0 0.0
        %2108 = vmatpush1.msra.mxu0 0.0
        %2109 = vmatprep.subr.mxu0 0.0
        %2110 = vmatpush1.msra.mxu0 0.0
        %2111 = vmatprep.subr.mxu0 0.0
        %2112 = vmatpush1.msra.mxu0 0.0
        %2113 = vmatprep.subr.mxu0 0.0
        %2114 = vmatpush1.msra.mxu0 0.0
        %2115 = vmatprep.subr.mxu0 0.0
        %2116 = vmatpush1.msra.mxu0 0.0
        %2117 = vmatprep.subr.mxu0 0.0
        %2118 = vmatpush1.msra.mxu0 0.0
        %2119 = vmatprep.subr.mxu0 0.0
        %2120 = vmatpush1.msra.mxu0 0.0
        %2121 = vmatprep.subr.mxu0 0.0
        %2122 = vmatpush1.msra.mxu0 0.0
        %2123 = vmatprep.subr.mxu0 0.0
        %2124 = vmatpush1.msra.mxu0 0.0
        %2125 = vmatprep.subr.mxu0 0.0
        %2126 = vmatpush1.msra.mxu0 0.0
        %2127 = vmatprep.subr.mxu0 0.0
        %2128 = vmatpush1.msra.mxu0 0.0
        %2129 = vmatprep.subr.mxu0 0.0
        %2130 = vmatpush1.msra.mxu0 0.0
        %2131 = vmatprep.subr.mxu0 0.0
        %2132 = vmatpush1.msra.mxu0 0.0
        %2133 = vmatprep.subr.mxu0 0.0
        %2134 = vmatpush1.msra.mxu0 0.0
        %2135 = vmatprep.subr.mxu0 0.0
        %2136 = vmatpush1.msra.mxu0 0.0
        %2137 = vmatprep.subr.mxu0 0.0
        %2138 = vmatpush1.msra.mxu0 0.0
        %2139 = vmatprep.subr.mxu0 0.0
        %2140 = vmatpush1.msra.mxu0 0.0
        %2141 = vmatprep.subr.mxu0 0.0
        %2142 = vmatpush1.msra.mxu0 0.0
        %2143 = vmatprep.subr.mxu0 0.0
        %2144 = vmatpush1.msra.mxu0 0.0
        %2145 = vmatprep.mubr.f32.mxu0 0.0
        %2146 = vmatmul.mubr.f32.gmra.mrb[0].mxu0 %v1637
        %v2147 = vpop.f32.mrb[0].mxu0
        %v2148 = vadd.f32 0.0, %v2147
        %v2149 = vpop.f32.mrb[0].mxu0
        %2150 = vdwg.mxu0
        %v2151 = vpack.c.bf16 %v2148, %v2148
        %v2152 = vld [vmem:[%s18] sm:$0xf]
        %v2153 = vld [vmem:[%s18 + $0x4] sm:$0xf]
        %v2154 = vld [vmem:[%s18 + $0x8] sm:$0xf]
        %v2155 = vld [vmem:[%s18 + $0xc] sm:$0xf]
        %v2160 = vunpack.c.l.b16 %v2152
        %v2161 = vunpack.c.l.b16 %v2153
        %v2162 = vunpack.c.l.b16 %v2154
        %v2163 = vunpack.c.l.b16 %v2155
        %v2164 = vpack.c.b16 %v2161, %v2160
        %v2165 = vpack.c.b16 %v2163, %v2162
        %v2169 = vsel %vm779, %v2151, 0
        %2171 = vmatprep.subr.bf16.mxu0 0
        %2172 = vmatpush1.bf16.msra.mxu0 %v2164
        %2173 = vmatprep.subr.bf16.mxu0 0
        %2174 = vmatpush1.bf16.msra.mxu0 %v2165
        %2175 = vmatprep.subr.bf16.mxu0 0
        %2176 = vmatpush1.bf16.msra.mxu0 0
        %2177 = vmatprep.subr.bf16.mxu0 0
        %2178 = vmatpush1.bf16.msra.mxu0 0
        %2179 = vmatprep.subr.bf16.mxu0 0
        %2180 = vmatpush1.bf16.msra.mxu0 0
        %2181 = vmatprep.subr.bf16.mxu0 0
        %2182 = vmatpush1.bf16.msra.mxu0 0
        %2183 = vmatprep.subr.bf16.mxu0 0
        %2184 = vmatpush1.bf16.msra.mxu0 0
        %2185 = vmatprep.subr.bf16.mxu0 0
        %2186 = vmatpush1.bf16.msra.mxu0 0
        %2187 = vmatprep.subr.bf16.mxu0 0
        %2188 = vmatpush1.bf16.msra.mxu0 0
        %2189 = vmatprep.subr.bf16.mxu0 0
        %2190 = vmatpush1.bf16.msra.mxu0 0
        %2191 = vmatprep.subr.bf16.mxu0 0
        %2192 = vmatpush1.bf16.msra.mxu0 0
        %2193 = vmatprep.subr.bf16.mxu0 0
        %2194 = vmatpush1.bf16.msra.mxu0 0
        %2195 = vmatprep.subr.bf16.mxu0 0
        %2196 = vmatpush1.bf16.msra.mxu0 0
        %2197 = vmatprep.subr.bf16.mxu0 0
        %2198 = vmatpush1.bf16.msra.mxu0 0
        %2199 = vmatprep.subr.bf16.mxu0 0
        %2200 = vmatpush1.bf16.msra.mxu0 0
        %2201 = vmatprep.subr.bf16.mxu0 0
        %2202 = vmatpush1.bf16.msra.mxu0 0
        %2203 = vmatprep.mubr.bf16.mxu0 0
        %2204 = vmatmul.mubr.bf16.gmra.mrb[0].mxu0 %v2169
        %v2205 = vpop.f32.mrb[0].mxu0
        %v2206 = vadd.f32 0.0, %v2205
        %v2207 = vpop.f32.mrb[0].mxu0
        %v2208 = vpop.f32.mrb[0].mxu0
        %v2209 = vpop.f32.mrb[0].mxu0
        %2210 = vdwg.mxu0
        %v2211 = vld [vmem:[#allocation3] sm:$0x3]
        %v2212 = vmul.f32 %v2211, 0.5
        %v2213 = vsel %vm1786, %v2212, 0.0
        %2214 = vadd.xlane.f32.xlu0 %v2213
        %v2215 = vpop.xlane.xlu0 %2214
        %v2216 = vrcp.pop %v2215
        %v2217 = vmul.f32 %v2212, %v2216
        %v2218 = vsel %vm918, %v2217, 0.0
        %v2221 = vcombine.low %v2206, %v2218
        %v2223 = vunpack.c.l.s4 1983009808
        %v2224 = vunpack.c.0.s8 %v2223
        %v2225 = vlaneseq
        %v2226 = vshrl.u32 %v2225, 7
        %v2227 = vsub.s32 %v2224, %v2226
        %v2228 = vrot.slane %v2221, %v2227
        %2230 = vst [vmem:[%s19] sm:$0xf] %v2228
      $region104: #{exposed_text_encoder.1} parent=95 // pred_fallthru
        _
      // Predicated region
      $region105: #{exposed_text_encoder.1} parent=95 // pred_check
        %p2231 = pneg %p502
      $region106: #{exposed_text_encoder.1} parent=95 // pred_check_branch
        %2233 = sbr.rel (%p2231) target = $region108
      $region107: #{exposed_text_encoder.1} parent=95 // pred_region
        _
      $region108: #{exposed_text_encoder.1} parent=95 // pred_fallthru
        _
      // Predicated region
      $region109: #{exposed_text_encoder.1} parent=95 // pred_check
        %p2234 = pneg %p502
      $region110: #{exposed_text_encoder.1} parent=95 // pred_check_branch
        %2236 = sbr.rel (%p2234) target = $region112
      $region111: #{exposed_text_encoder.1} parent=95 // pred_region
        _
      $region112: #{exposed_text_encoder.1} parent=95 // pred_fallthru
        _
    $region96: #{exposed_text_encoder.1} parent=5 // pred_fallthru
      _
    %p2237 = scmp.le.s32.totalorder 2, %s25
    // Predicated region
    $region113: #{exposed_text_encoder.1} parent=5 // pred_check
      %p2238 = pneg %p2237
    $region114: #{exposed_text_encoder.1} parent=5 // pred_check_branch
      %2240 = sbr.rel (%p2238) target = $region116
    $region115: #{exposed_text_encoder.1} parent=5 // pred_region
      %s2241 = ssub.s32 %s25, 2
    $region116: #{exposed_text_encoder.1} parent=5 // pred_fallthru
      _
  $region6: #{exposed_text_encoder.1} parent=0 // loop_footer
    %s29 = sadd.s32 1, %s25
  $region7: #{exposed_text_encoder.1} parent=0 // loop_footer_branch
    %24 = sbr.rel target = $region3
  $region8: #{exposed_text_encoder.1} parent=0 // loop_exit
    _

</llo_original>
